<compile_context>
chip_gen: v5e
topology: v5e:2x2
jax: 0.10.0
libtpu: 0.0.40
codegen_flags: <defaults>
</compile_context>

<pallas_src>
import functools

import jax
import jax.numpy as jnp
from jax import lax
from jax.experimental import pallas as pl
from jax.experimental.pallas import tpu as pltpu


def _round_up(x, m):
    return ((x + m - 1) // m) * m


def _lstm_fc_kernel(x_ref, wih_ref, whh_ref, b_ref, wfc_ref, bfc_ref,
                    out_ref, a_scr, h0_scr, c0_scr, h1_scr, c1_scr, *,
                    seq_len, batch_blk, hidden, unroll):
    """Per batch block (gate lanes packed as [i | f | o | g], width 4H <= Gp):
       x_ref   : (T*Bb, I)   bf16   time-major rows (t*Bb + j)
       wih_ref : (I, Gp)     bf16
       whh_ref : (H, Gp)     bf16
       b_ref   : (1, Gp)     f32    (b_ih + b_hh, packed / zero-padded)
       wfc_ref : (H, Cp)     bf16
       bfc_ref : (1, Cp)     f32
       out_ref : (Bb, Cp)    f32
       a_scr   : (T*Bb, Gp)  f32    hoisted input-projection pre-activations
       h*/c*   : (Bh, H)     f32    LSTM state, one pair per batch half
    """
    T, Bb, H = seq_len, batch_blk, hidden
    Bh = Bb // 2
    h_scr = (h0_scr, h1_scr)
    c_scr = (c0_scr, c1_scr)

    # ---- Phase 1: input projection for ALL timesteps in one MXU matmul ----
    # (bf16 operands, fp32 accumulation); bias added once, not per step.
    a_scr[...] = (
        jnp.dot(x_ref[...], wih_ref[...], preferred_element_type=jnp.float32)
        + b_ref[...]
    )

    # h0 = c0 = 0 (PyTorch default when no initial state is given).
    for k in range(2):
        h_scr[k][...] = jnp.zeros_like(h_scr[k])
        c_scr[k][...] = jnp.zeros_like(c_scr[k])

    # ---- Phase 2: serial recurrence over two independent batch halves ----
    # The halves form two independent dependency chains, so half B's Whh
    # matmul (MXU) can overlap half A's gate sigmoid/tanh + c/h update
    # (VPU/EUP), instead of serializing MXU and vector work inside a step.
    def step(t, carry):
        base = t * Bb
        gates = []
        for k in range(2):
            row = pl.multiple_of(base + k * Bh, 8)
            a_t = a_scr[pl.ds(row, Bh), :]                       # (Bh, Gp) f32
            hh = h_scr[k][...].astype(jnp.bfloat16)              # (Bh, H) bf16
            gates.append(
                a_t + jnp.dot(hh, whh_ref[...],
                              preferred_element_type=jnp.float32))
        for k in range(2):
            g = gates[k]
            sig = jax.nn.sigmoid(g[:, 0:3 * H])                  # [i | f | o]
            i_g = sig[:, 0 * H:1 * H]
            f_g = sig[:, 1 * H:2 * H]
            o_g = sig[:, 2 * H:3 * H]
            g_g = jnp.tanh(g[:, 3 * H:4 * H])
            c_new = f_g * c_scr[k][...] + i_g * g_g
            c_scr[k][...] = c_new
            h_scr[k][...] = o_g * jnp.tanh(c_new)
        return carry

    lax.fori_loop(0, T, step, 0, unroll=unroll)

    # ---- Phase 3: classifier head on the final hidden state ----
    # bf16 operands, fp32 accumulation, fp32 bias, lane-dense (Cp % 128 == 0).
    for k in range(2):
        out_ref[pl.ds(k * Bh, Bh), :] = (
            jnp.dot(h_scr[k][...].astype(jnp.bfloat16), wfc_ref[...],
                    preferred_element_type=jnp.float32)
            + bfc_ref[...]
        )


def _choose_batch_block(batch):
    """Pick (Bb, B_pad): Bb multiple of 16 (bf16 lhs sublanes), capped at 128,
    and chosen so nb = B_pad // Bb >= 2 whenever the batch is large enough —
    keeps both v7x TensorCores fed via the parallel grid axis."""
    b_pad = _round_up(max(batch, 1), 16)
    if b_pad <= 16:
        return 16, 16
    bb = min(128, _round_up((b_pad + 1) // 2, 16))
    return bb, _round_up(b_pad, bb)


def sign_lstm_forward(x, params):
    """x: (B, T, I) float32.  Returns (B, num_classes) float32."""
    B, T, I = x.shape
    H = params["w_hh"].shape[1]          # w_hh: (4H, H)
    C = params["w_fc"].shape[0]          # w_fc: (C, H)

    Gp = _round_up(4 * H, 128)           # packed gate lanes [i|f|o|g]
    Cp = _round_up(C, 128)               # lane-dense output store
    Bb, B_pad = _choose_batch_block(B)
    nb = B_pad // Bb
    Bh = Bb // 2

    f32, bf16 = jnp.float32, jnp.bfloat16

    def pack_gate_cols(w):
        # torch layout (4H, cols) with gate-major rows [i; f; g; o]
        # -> (cols, Gp) with packed lanes [i | f | o | g], zero-padded tail.
        wi, wf, wg, wo = jnp.split(w.astype(f32), 4, axis=0)
        packed = jnp.concatenate([wi, wf, wo, wg], axis=0).T     # (cols, 4H)
        return jnp.pad(packed, ((0, 0), (0, Gp - 4 * H)))

    wih = pack_gate_cols(params["w_ih"]).astype(bf16)            # (I, Gp)
    whh = pack_gate_cols(params["w_hh"]).astype(bf16)            # (H, Gp)
    b = pack_gate_cols((params["b_ih"] + params["b_hh"])[:, None])  # (1, Gp) f32
    wfc = jnp.pad(params["w_fc"].T.astype(f32),
                  ((0, 0), (0, Cp - C))).astype(bf16)            # (H, Cp)
    bfc = jnp.pad(params["b_fc"].astype(f32), (0, Cp - C)).reshape(1, Cp)

    # x: (B,T,I) -> batch-block-major, time-major within block: (nb*T*Bb, I).
    x_p = jnp.pad(x.astype(f32), ((0, B_pad - B), (0, 0), (0, 0)))
    x_blk = (x_p.reshape(nb, Bb, T, I)
                 .transpose(0, 2, 1, 3)                 # (nb, T, Bb, I)
                 .reshape(nb * T * Bb, I)
                 .astype(bf16))

    kernel = functools.partial(_lstm_fc_kernel, seq_len=T, batch_blk=Bb,
                               hidden=H, unroll=min(T, 8))

    # VMEM budget: double-buffered pallas blocks + scratch, 2x margin,
    # capped well under v7x's 64 MiB physical VMEM per TensorCore.
    def _buf_bytes(shape, dtype):
        sub, size = (16, 2) if dtype == bf16 else (8, 4)
        return _round_up(shape[0], sub) * _round_up(shape[1], 128) * size

    io_bytes = 2 * (_buf_bytes((T * Bb, I), bf16)
                    + _buf_bytes((I, Gp), bf16)
                    + _buf_bytes((H, Gp), bf16)
                    + _buf_bytes((1, Gp), f32)
                    + _buf_bytes((H, Cp), bf16)
                    + _buf_bytes((1, Cp), f32)
                    + _buf_bytes((Bb, Cp), f32))
    scratch_bytes = (_buf_bytes((T * Bb, Gp), f32)
                     + 4 * _buf_bytes((Bh, H), f32))
    vmem_limit = int(min(48 * 2**20,
                         max(16 * 2**20, 2 * (io_bytes + scratch_bytes))))

    out_full = pl.pallas_call(
        kernel,
        out_shape=jax.ShapeDtypeStruct((B_pad, Cp), f32),
        grid=(nb,),
        in_specs=[
            pl.BlockSpec((T * Bb, I), lambda bi: (bi, 0)),      # x (per block)
            # TODO(synk): pipeline_mode=pl.Buffered(1) on these constant-weight
            # specs at production H to avoid double-buffering them in VMEM.
            pl.BlockSpec((I, Gp), lambda bi: (0, 0)),           # Wih
            pl.BlockSpec((H, Gp), lambda bi: (0, 0)),           # Whh
            pl.BlockSpec((1, Gp), lambda bi: (0, 0)),           # bias
            pl.BlockSpec((H, Cp), lambda bi: (0, 0)),           # Wfc
            pl.BlockSpec((1, Cp), lambda bi: (0, 0)),           # bfc
        ],
        out_specs=pl.BlockSpec((Bb, Cp), lambda bi: (bi, 0)),
        scratch_shapes=[
            pltpu.VMEM((T * Bb, Gp), f32),   # pre-activations A
            pltpu.VMEM((Bh, H), f32),        # h state, half 0
            pltpu.VMEM((Bh, H), f32),        # c state, half 0
            pltpu.VMEM((Bh, H), f32),        # h state, half 1
            pltpu.VMEM((Bh, H), f32),        # c state, half 1
        ],
        compiler_params=pltpu.CompilerParams(
            dimension_semantics=("parallel",),
            vmem_limit_bytes=vmem_limit,
        ),
    )(x_blk, wih, whh, b, wfc, bfc)

    return out_full[:B, :C]


def _reference_forward(x, params):
    """Pure-JAX fp32 reference with identical semantics (for validation)."""
    H = params["w_hh"].shape[1]
    B = x.shape[0]
    wih_t = params["w_ih"].T
    whh_t = params["w_hh"].T
    b = params["b_ih"] + params["b_hh"]

    def step(carry, x_t):
        h, c = carry
        gates = x_t @ wih_t + h @ whh_t + b
        i = jax.nn.sigmoid(gates[:, 0 * H:1 * H])
        f = jax.nn.sigmoid(gates[:, 1 * H:2 * H])
        g = jnp.tanh(gates[:, 2 * H:3 * H])
        o = jax.nn.sigmoid(gates[:, 3 * H:4 * H])
        c = f * c + i * g
        h = o * jnp.tanh(c)
        return (h, c), None

    h0 = jnp.zeros((B, H), jnp.float32)
    c0 = jnp.zeros((B, H), jnp.float32)
    (hn, _), _ = lax.scan(step, (h0, c0), jnp.transpose(x, (1, 0, 2)))
    return hn @ params["w_fc"].T + params["b_fc"]


def init_params(key, input_size, hidden_size, num_classes):
    """Deterministic init mimicking PyTorch's U(-1/sqrt(H), 1/sqrt(H))."""
    ks = jax.random.split(key, 6)
    bound = 1.0 / jnp.sqrt(jnp.float32(hidden_size))
    u = lambda k, shape: jax.random.uniform(
        k, shape, jnp.float32, minval=-bound, maxval=bound)
    return {
        "w_ih": u(ks[0], (4 * hidden_size, input_size)),
        "w_hh": u(ks[1], (4 * hidden_size, hidden_size)),
        "b_ih": u(ks[2], (4 * hidden_size,)),
        "b_hh": u(ks[3], (4 * hidden_size,)),
        "w_fc": u(ks[4], (num_classes, hidden_size)),
        "b_fc": u(ks[5], (num_classes,)),
    }


if __name__ == "__main__":
    B, T, I, H, C = 2, 8, 16, 32, 5

    key = jax.random.PRNGKey(0)
    k_x, k_p = jax.random.split(key)
    x = jax.random.normal(k_x, (B, T, I), dtype=jnp.float32)
    params = init_params(k_p, I, H, C)

    out = sign_lstm_forward(x, params)
    out = jax.block_until_ready(out)

    ref = jax.block_until_ready(_reference_forward(x, params))
    assert out.shape == (B, C)
    # bf16 matmul operands (fp32 accumulation / state) -> relaxed tolerance.
    assert jnp.allclose(out, ref, atol=5e-2, rtol=5e-2), (out, ref)

    print("KERNEL_OK")
</pallas_src>

<mosaic_0001>
module attributes {stable_mosaic.version = 11 : i64} {
  func.func @_lstm_fc_kernel(%arg0: i32, %arg1: memref<128x16xbf16, #tpu.memory_space<vmem>>, %arg2: memref<16x128xbf16, #tpu.memory_space<vmem>>, %arg3: memref<32x128xbf16, #tpu.memory_space<vmem>>, %arg4: memref<1x128xf32, #tpu.memory_space<vmem>>, %arg5: memref<32x128xbf16, #tpu.memory_space<vmem>>, %arg6: memref<1x128xf32, #tpu.memory_space<vmem>>, %arg7: memref<16x128xf32, #tpu.memory_space<vmem>>, %arg8: memref<128x128xf32, #tpu.memory_space<vmem>>, %arg9: memref<8x32xf32, #tpu.memory_space<vmem>>, %arg10: memref<8x32xf32, #tpu.memory_space<vmem>>, %arg11: memref<8x32xf32, #tpu.memory_space<vmem>>, %arg12: memref<8x32xf32, #tpu.memory_space<vmem>>) attributes {dimension_semantics = [#tpu.dimension_semantics<parallel>], iteration_bounds = array<i64: 1>, scalar_prefetch = 0 : i64, scratch_operands = 5 : i64, tpu.core_type = #tpu.core_type<tc>, window_params = [{transform_indices = @transform_0, window_bounds = array<i64: 128, 16>}, {pipeline_mode = #tpu.pipeline_mode<synchronous>, transform_indices = @transform_1, window_bounds = array<i64: 16, 128>}, {pipeline_mode = #tpu.pipeline_mode<synchronous>, transform_indices = @transform_2, window_bounds = array<i64: 32, 128>}, {pipeline_mode = #tpu.pipeline_mode<synchronous>, transform_indices = @transform_3, window_bounds = array<i64: 1, 128>}, {pipeline_mode = #tpu.pipeline_mode<synchronous>, transform_indices = @transform_4, window_bounds = array<i64: 32, 128>}, {pipeline_mode = #tpu.pipeline_mode<synchronous>, transform_indices = @transform_5, window_bounds = array<i64: 1, 128>}, {transform_indices = @transform_6, window_bounds = array<i64: 16, 128>}]} {
    %c0 = arith.constant 0 : index
    %c0_0 = arith.constant 0 : index
    %0 = vector.load %arg1[%c0, %c0_0] : memref<128x16xbf16, #tpu.memory_space<vmem>>, vector<128x16xbf16>
    %c0_1 = arith.constant 0 : index
    %c0_2 = arith.constant 0 : index
    %1 = vector.load %arg2[%c0_1, %c0_2] : memref<16x128xbf16, #tpu.memory_space<vmem>>, vector<16x128xbf16>
    %cst = arith.constant dense<0.000000e+00> : vector<128x128xf32>
    %2 = tpu.matmul %0, %1, %cst {dimension_numbers = #tpu.dot_dimension_numbers<[1], [0], [0], [1], [0, 0, 1, 1], [], []>} : vector<128x16xbf16>, vector<16x128xbf16>, vector<128x128xf32> -> vector<128x128xf32>
    %c0_3 = arith.constant 0 : index
    %c0_4 = arith.constant 0 : index
    %3 = vector.load %arg4[%c0_3, %c0_4] : memref<1x128xf32, #tpu.memory_space<vmem>>, vector<1x128xf32>
    %4 = vector.broadcast %3 : vector<1x128xf32> to vector<128x128xf32>
    %5 = arith.addf %2, %4 : vector<128x128xf32>
    %c0_5 = arith.constant 0 : index
    %c0_6 = arith.constant 0 : index
    %6 = vector.load %arg8[%c0_5, %c0_6] : memref<128x128xf32, #tpu.memory_space<vmem>>, vector<128x128xf32>
    tpu.vector_store %arg8[%c0_5, %c0_6], %5 {strides = array<i32>} : memref<128x128xf32, #tpu.memory_space<vmem>>, vector<128x128xf32>,
    %cst_7 = arith.constant 0.000000e+00 : f32
    %7 = vector.broadcast %cst_7 : f32 to vector<8x32xf32>
    %c0_8 = arith.constant 0 : index
    %c0_9 = arith.constant 0 : index
    %8 = vector.load %arg9[%c0_8, %c0_9] : memref<8x32xf32, #tpu.memory_space<vmem>>, vector<8x32xf32>
    tpu.vector_store %arg9[%c0_8, %c0_9], %7 {strides = array<i32>} : memref<8x32xf32, #tpu.memory_space<vmem>>, vector<8x32xf32>,
    %cst_10 = arith.constant 0.000000e+00 : f32
    %9 = vector.broadcast %cst_10 : f32 to vector<8x32xf32>
    %c0_11 = arith.constant 0 : index
    %c0_12 = arith.constant 0 : index
    %10 = vector.load %arg10[%c0_11, %c0_12] : memref<8x32xf32, #tpu.memory_space<vmem>>, vector<8x32xf32>
    tpu.vector_store %arg10[%c0_11, %c0_12], %9 {strides = array<i32>} : memref<8x32xf32, #tpu.memory_space<vmem>>, vector<8x32xf32>,
    %cst_13 = arith.constant 0.000000e+00 : f32
    %11 = vector.broadcast %cst_13 : f32 to vector<8x32xf32>
    %c0_14 = arith.constant 0 : index
    %c0_15 = arith.constant 0 : index
    %12 = vector.load %arg11[%c0_14, %c0_15] : memref<8x32xf32, #tpu.memory_space<vmem>>, vector<8x32xf32>
    tpu.vector_store %arg11[%c0_14, %c0_15], %11 {strides = array<i32>} : memref<8x32xf32, #tpu.memory_space<vmem>>, vector<8x32xf32>,
    %cst_16 = arith.constant 0.000000e+00 : f32
    %13 = vector.broadcast %cst_16 : f32 to vector<8x32xf32>
    %c0_17 = arith.constant 0 : index
    %c0_18 = arith.constant 0 : index
    %14 = vector.load %arg12[%c0_17, %c0_18] : memref<8x32xf32, #tpu.memory_space<vmem>>, vector<8x32xf32>
    tpu.vector_store %arg12[%c0_17, %c0_18], %13 {strides = array<i32>} : memref<8x32xf32, #tpu.memory_space<vmem>>, vector<8x32xf32>,
    %c0_i32 = arith.constant 0 : i32
    %c16_i32 = arith.constant 16 : i32
    %15 = arith.muli %c0_i32, %c16_i32 : i32
    %c0_i32_19 = arith.constant 0 : i32
    %16 = arith.addi %15, %c0_i32_19 : i32
    %17 = tpu.assume_multiple %16, 8 : i32
    %18 = arith.index_cast %17 : i32 to index
    %c0_20 = arith.constant 0 : index
    %19 = vector.load %arg8[%18, %c0_20] : memref<128x128xf32, #tpu.memory_space<vmem>>, vector<8x128xf32>
    %c0_21 = arith.constant 0 : index
    %c0_22 = arith.constant 0 : index
    %20 = vector.load %arg9[%c0_21, %c0_22] : memref<8x32xf32, #tpu.memory_space<vmem>>, vector<8x32xf32>
    %21 = arith.truncf %20 : vector<8x32xf32> to vector<8x32xbf16>
    %c0_23 = arith.constant 0 : index
    %c0_24 = arith.constant 0 : index
    %22 = vector.load %arg3[%c0_23, %c0_24] : memref<32x128xbf16, #tpu.memory_space<vmem>>, vector<32x128xbf16>
    %cst_25 = arith.constant dense<0.000000e+00> : vector<8x128xf32>
    %23 = tpu.matmul %21, %22, %cst_25 {dimension_numbers = #tpu.dot_dimension_numbers<[1], [0], [0], [1], [0, 0, 1, 1], [], []>} : vector<8x32xbf16>, vector<32x128xbf16>, vector<8x128xf32> -> vector<8x128xf32>
    %24 = arith.addf %19, %23 : vector<8x128xf32>
    %c8_i32 = arith.constant 8 : i32
    %25 = arith.addi %15, %c8_i32 : i32
    %26 = tpu.assume_multiple %25, 8 : i32
    %27 = arith.index_cast %26 : i32 to index
    %c0_26 = arith.constant 0 : index
    %28 = vector.load %arg8[%27, %c0_26] : memref<128x128xf32, #tpu.memory_space<vmem>>, vector<8x128xf32>
    %c0_27 = arith.constant 0 : index
    %c0_28 = arith.constant 0 : index
    %29 = vector.load %arg11[%c0_27, %c0_28] : memref<8x32xf32, #tpu.memory_space<vmem>>, vector<8x32xf32>
    %30 = arith.truncf %29 : vector<8x32xf32> to vector<8x32xbf16>
    %c0_29 = arith.constant 0 : index
    %c0_30 = arith.constant 0 : index
    %31 = vector.load %arg3[%c0_29, %c0_30] : memref<32x128xbf16, #tpu.memory_space<vmem>>, vector<32x128xbf16>
    %cst_31 = arith.constant dense<0.000000e+00> : vector<8x128xf32>
    %32 = tpu.matmul %30, %31, %cst_31 {dimension_numbers = #tpu.dot_dimension_numbers<[1], [0], [0], [1], [0, 0, 1, 1], [], []>} : vector<8x32xbf16>, vector<32x128xbf16>, vector<8x128xf32> -> vector<8x128xf32>
    %33 = arith.addf %28, %32 : vector<8x128xf32>
    %34 = vector.extract_strided_slice %24 {offsets = [0, 0], sizes = [8, 96], strides = [1, 1]} : vector<8x128xf32> to vector<8x96xf32>
    %35 = arith.negf %34 : vector<8x96xf32>
    %36 = math.exp %35 : vector<8x96xf32>
    %cst_32 = arith.constant 1.000000e+00 : f32
    %37 = vector.broadcast %cst_32 : f32 to vector<8x96xf32>
    %38 = arith.addf %37, %36 : vector<8x96xf32>
    %39 = arith.divf %37, %38 : vector<8x96xf32>
    %40 = vector.extract_strided_slice %39 {offsets = [0, 0], sizes = [8, 32], strides = [1, 1]} : vector<8x96xf32> to vector<8x32xf32>
    %41 = vector.extract_strided_slice %39 {offsets = [0, 32], sizes = [8, 32], strides = [1, 1]} : vector<8x96xf32> to vector<8x32xf32>
    %42 = vector.extract_strided_slice %39 {offsets = [0, 64], sizes = [8, 32], strides = [1, 1]} : vector<8x96xf32> to vector<8x32xf32>
    %43 = vector.extract_strided_slice %24 {offsets = [0, 96], sizes = [8, 32], strides = [1, 1]} : vector<8x128xf32> to vector<8x32xf32>
    %44 = math.tanh %43 : vector<8x32xf32>
    %c0_33 = arith.constant 0 : index
    %c0_34 = arith.constant 0 : index
    %45 = vector.load %arg10[%c0_33, %c0_34] : memref<8x32xf32, #tpu.memory_space<vmem>>, vector<8x32xf32>
    %46 = arith.mulf %41, %45 : vector<8x32xf32>
    %47 = arith.mulf %40, %44 : vector<8x32xf32>
    %48 = arith.addf %46, %47 : vector<8x32xf32>
    %c0_35 = arith.constant 0 : index
    %c0_36 = arith.constant 0 : index
    %49 = vector.load %arg10[%c0_35, %c0_36] : memref<8x32xf32, #tpu.memory_space<vmem>>, vector<8x32xf32>
    tpu.vector_store %arg10[%c0_35, %c0_36], %48 {strides = array<i32>} : memref<8x32xf32, #tpu.memory_space<vmem>>, vector<8x32xf32>,
    %50 = math.tanh %48 : vector<8x32xf32>
    %51 = arith.mulf %42, %50 : vector<8x32xf32>
    %c0_37 = arith.constant 0 : index
    %c0_38 = arith.constant 0 : index
    %52 = vector.load %arg9[%c0_37, %c0_38] : memref<8x32xf32, #tpu.memory_space<vmem>>, vector<8x32xf32>
    tpu.vector_store %arg9[%c0_37, %c0_38], %51 {strides = array<i32>} : memref<8x32xf32, #tpu.memory_space<vmem>>, vector<8x32xf32>,
    %53 = vector.extract_strided_slice %33 {offsets = [0, 0], sizes = [8, 96], strides = [1, 1]} : vector<8x128xf32> to vector<8x96xf32>
    %54 = arith.negf %53 : vector<8x96xf32>
    %55 = math.exp %54 : vector<8x96xf32>
    %cst_39 = arith.constant 1.000000e+00 : f32
    %56 = vector.broadcast %cst_39 : f32 to vector<8x96xf32>
    %57 = arith.addf %56, %55 : vector<8x96xf32>
    %58 = arith.divf %56, %57 : vector<8x96xf32>
    %59 = vector.extract_strided_slice %58 {offsets = [0, 0], sizes = [8, 32], strides = [1, 1]} : vector<8x96xf32> to vector<8x32xf32>
    %60 = vector.extract_strided_slice %58 {offsets = [0, 32], sizes = [8, 32], strides = [1, 1]} : vector<8x96xf32> to vector<8x32xf32>
    %61 = vector.extract_strided_slice %58 {offsets = [0, 64], sizes = [8, 32], strides = [1, 1]} : vector<8x96xf32> to vector<8x32xf32>
    %62 = vector.extract_strided_slice %33 {offsets = [0, 96], sizes = [8, 32], strides = [1, 1]} : vector<8x128xf32> to vector<8x32xf32>
    %63 = math.tanh %62 : vector<8x32xf32>
    %c0_40 = arith.constant 0 : index
    %c0_41 = arith.constant 0 : index
    %64 = vector.load %arg12[%c0_40, %c0_41] : memref<8x32xf32, #tpu.memory_space<vmem>>, vector<8x32xf32>
    %65 = arith.mulf %60, %64 : vector<8x32xf32>
    %66 = arith.mulf %59, %63 : vector<8x32xf32>
    %67 = arith.addf %65, %66 : vector<8x32xf32>
    %c0_42 = arith.constant 0 : index
    %c0_43 = arith.constant 0 : index
    %68 = vector.load %arg12[%c0_42, %c0_43] : memref<8x32xf32, #tpu.memory_space<vmem>>, vector<8x32xf32>
    tpu.vector_store %arg12[%c0_42, %c0_43], %67 {strides = array<i32>} : memref<8x32xf32, #tpu.memory_space<vmem>>, vector<8x32xf32>,
    %69 = math.tanh %67 : vector<8x32xf32>
    %70 = arith.mulf %61, %69 : vector<8x32xf32>
    %c0_44 = arith.constant 0 : index
    %c0_45 = arith.constant 0 : index
    %71 = vector.load %arg11[%c0_44, %c0_45] : memref<8x32xf32, #tpu.memory_space<vmem>>, vector<8x32xf32>
    tpu.vector_store %arg11[%c0_44, %c0_45], %70 {strides = array<i32>} : memref<8x32xf32, #tpu.memory_space<vmem>>, vector<8x32xf32>,
    %c1_i32 = arith.constant 1 : i32
    %c16_i32_46 = arith.constant 16 : i32
    %72 = arith.muli %c1_i32, %c16_i32_46 : i32
    %c0_i32_47 = arith.constant 0 : i32
    %73 = arith.addi %72, %c0_i32_47 : i32
    %74 = tpu.assume_multiple %73, 8 : i32
    %75 = arith.index_cast %74 : i32 to index
    %c0_48 = arith.constant 0 : index
    %76 = vector.load %arg8[%75, %c0_48] : memref<128x128xf32, #tpu.memory_space<vmem>>, vector<8x128xf32>
    %c0_49 = arith.constant 0 : index
    %c0_50 = arith.constant 0 : index
    %77 = vector.load %arg9[%c0_49, %c0_50] : memref<8x32xf32, #tpu.memory_space<vmem>>, vector<8x32xf32>
    %78 = arith.truncf %77 : vector<8x32xf32> to vector<8x32xbf16>
    %c0_51 = arith.constant 0 : index
    %c0_52 = arith.constant 0 : index
    %79 = vector.load %arg3[%c0_51, %c0_52] : memref<32x128xbf16, #tpu.memory_space<vmem>>, vector<32x128xbf16>
    %cst_53 = arith.constant dense<0.000000e+00> : vector<8x128xf32>
    %80 = tpu.matmul %78, %79, %cst_53 {dimension_numbers = #tpu.dot_dimension_numbers<[1], [0], [0], [1], [0, 0, 1, 1], [], []>} : vector<8x32xbf16>, vector<32x128xbf16>, vector<8x128xf32> -> vector<8x128xf32>
    %81 = arith.addf %76, %80 : vector<8x128xf32>
    %c8_i32_54 = arith.constant 8 : i32
    %82 = arith.addi %72, %c8_i32_54 : i32
    %83 = tpu.assume_multiple %82, 8 : i32
    %84 = arith.index_cast %83 : i32 to index
    %c0_55 = arith.constant 0 : index
    %85 = vector.load %arg8[%84, %c0_55] : memref<128x128xf32, #tpu.memory_space<vmem>>, vector<8x128xf32>
    %c0_56 = arith.constant 0 : index
    %c0_57 = arith.constant 0 : index
    %86 = vector.load %arg11[%c0_56, %c0_57] : memref<8x32xf32, #tpu.memory_space<vmem>>, vector<8x32xf32>
    %87 = arith.truncf %86 : vector<8x32xf32> to vector<8x32xbf16>
    %c0_58 = arith.constant 0 : index
    %c0_59 = arith.constant 0 : index
    %88 = vector.load %arg3[%c0_58, %c0_59] : memref<32x128xbf16, #tpu.memory_space<vmem>>, vector<32x128xbf16>
    %cst_60 = arith.constant dense<0.000000e+00> : vector<8x128xf32>
    %89 = tpu.matmul %87, %88, %cst_60 {dimension_numbers = #tpu.dot_dimension_numbers<[1], [0], [0], [1], [0, 0, 1, 1], [], []>} : vector<8x32xbf16>, vector<32x128xbf16>, vector<8x128xf32> -> vector<8x128xf32>
    %90 = arith.addf %85, %89 : vector<8x128xf32>
    %91 = vector.extract_strided_slice %81 {offsets = [0, 0], sizes = [8, 96], strides = [1, 1]} : vector<8x128xf32> to vector<8x96xf32>
    %92 = arith.negf %91 : vector<8x96xf32>
    %93 = math.exp %92 : vector<8x96xf32>
    %cst_61 = arith.constant 1.000000e+00 : f32
    %94 = vector.broadcast %cst_61 : f32 to vector<8x96xf32>
    %95 = arith.addf %94, %93 : vector<8x96xf32>
    %96 = arith.divf %94, %95 : vector<8x96xf32>
    %97 = vector.extract_strided_slice %96 {offsets = [0, 0], sizes = [8, 32], strides = [1, 1]} : vector<8x96xf32> to vector<8x32xf32>
    %98 = vector.extract_strided_slice %96 {offsets = [0, 32], sizes = [8, 32], strides = [1, 1]} : vector<8x96xf32> to vector<8x32xf32>
    %99 = vector.extract_strided_slice %96 {offsets = [0, 64], sizes = [8, 32], strides = [1, 1]} : vector<8x96xf32> to vector<8x32xf32>
    %100 = vector.extract_strided_slice %81 {offsets = [0, 96], sizes = [8, 32], strides = [1, 1]} : vector<8x128xf32> to vector<8x32xf32>
    %101 = math.tanh %100 : vector<8x32xf32>
    %c0_62 = arith.constant 0 : index
    %c0_63 = arith.constant 0 : index
    %102 = vector.load %arg10[%c0_62, %c0_63] : memref<8x32xf32, #tpu.memory_space<vmem>>, vector<8x32xf32>
    %103 = arith.mulf %98, %102 : vector<8x32xf32>
    %104 = arith.mulf %97, %101 : vector<8x32xf32>
    %105 = arith.addf %103, %104 : vector<8x32xf32>
    %c0_64 = arith.constant 0 : index
    %c0_65 = arith.constant 0 : index
    %106 = vector.load %arg10[%c0_64, %c0_65] : memref<8x32xf32, #tpu.memory_space<vmem>>, vector<8x32xf32>
    tpu.vector_store %arg10[%c0_64, %c0_65], %105 {strides = array<i32>} : memref<8x32xf32, #tpu.memory_space<vmem>>, vector<8x32xf32>,
    %107 = math.tanh %105 : vector<8x32xf32>
    %108 = arith.mulf %99, %107 : vector<8x32xf32>
    %c0_66 = arith.constant 0 : index
    %c0_67 = arith.constant 0 : index
    %109 = vector.load %arg9[%c0_66, %c0_67] : memref<8x32xf32, #tpu.memory_space<vmem>>, vector<8x32xf32>
    tpu.vector_store %arg9[%c0_66, %c0_67], %108 {strides = array<i32>} : memref<8x32xf32, #tpu.memory_space<vmem>>, vector<8x32xf32>,
    %110 = vector.extract_strided_slice %90 {offsets = [0, 0], sizes = [8, 96], strides = [1, 1]} : vector<8x128xf32> to vector<8x96xf32>
    %111 = arith.negf %110 : vector<8x96xf32>
    %112 = math.exp %111 : vector<8x96xf32>
    %cst_68 = arith.constant 1.000000e+00 : f32
    %113 = vector.broadcast %cst_68 : f32 to vector<8x96xf32>
    %114 = arith.addf %113, %112 : vector<8x96xf32>
    %115 = arith.divf %113, %114 : vector<8x96xf32>
    %116 = vector.extract_strided_slice %115 {offsets = [0, 0], sizes = [8, 32], strides = [1, 1]} : vector<8x96xf32> to vector<8x32xf32>
    %117 = vector.extract_strided_slice %115 {offsets = [0, 32], sizes = [8, 32], strides = [1, 1]} : vector<8x96xf32> to vector<8x32xf32>
    %118 = vector.extract_strided_slice %115 {offsets = [0, 64], sizes = [8, 32], strides = [1, 1]} : vector<8x96xf32> to vector<8x32xf32>
    %119 = vector.extract_strided_slice %90 {offsets = [0, 96], sizes = [8, 32], strides = [1, 1]} : vector<8x128xf32> to vector<8x32xf32>
    %120 = math.tanh %119 : vector<8x32xf32>
    %c0_69 = arith.constant 0 : index
    %c0_70 = arith.constant 0 : index
    %121 = vector.load %arg12[%c0_69, %c0_70] : memref<8x32xf32, #tpu.memory_space<vmem>>, vector<8x32xf32>
    %122 = arith.mulf %117, %121 : vector<8x32xf32>
    %123 = arith.mulf %116, %120 : vector<8x32xf32>
    %124 = arith.addf %122, %123 : vector<8x32xf32>
    %c0_71 = arith.constant 0 : index
    %c0_72 = arith.constant 0 : index
    %125 = vector.load %arg12[%c0_71, %c0_72] : memref<8x32xf32, #tpu.memory_space<vmem>>, vector<8x32xf32>
    tpu.vector_store %arg12[%c0_71, %c0_72], %124 {strides = array<i32>} : memref<8x32xf32, #tpu.memory_space<vmem>>, vector<8x32xf32>,
    %126 = math.tanh %124 : vector<8x32xf32>
    %127 = arith.mulf %118, %126 : vector<8x32xf32>
    %c0_73 = arith.constant 0 : index
    %c0_74 = arith.constant 0 : index
    %128 = vector.load %arg11[%c0_73, %c0_74] : memref<8x32xf32, #tpu.memory_space<vmem>>, vector<8x32xf32>
    tpu.vector_store %arg11[%c0_73, %c0_74], %127 {strides = array<i32>} : memref<8x32xf32, #tpu.memory_space<vmem>>, vector<8x32xf32>,
    %c2_i32 = arith.constant 2 : i32
    %c16_i32_75 = arith.constant 16 : i32
    %129 = arith.muli %c2_i32, %c16_i32_75 : i32
    %c0_i32_76 = arith.constant 0 : i32
    %130 = arith.addi %129, %c0_i32_76 : i32
    %131 = tpu.assume_multiple %130, 8 : i32
    %132 = arith.index_cast %131 : i32 to index
    %c0_77 = arith.constant 0 : index
    %133 = vector.load %arg8[%132, %c0_77] : memref<128x128xf32, #tpu.memory_space<vmem>>, vector<8x128xf32>
    %c0_78 = arith.constant 0 : index
    %c0_79 = arith.constant 0 : index
    %134 = vector.load %arg9[%c0_78, %c0_79] : memref<8x32xf32, #tpu.memory_space<vmem>>, vector<8x32xf32>
    %135 = arith.truncf %134 : vector<8x32xf32> to vector<8x32xbf16>
    %c0_80 = arith.constant 0 : index
    %c0_81 = arith.constant 0 : index
    %136 = vector.load %arg3[%c0_80, %c0_81] : memref<32x128xbf16, #tpu.memory_space<vmem>>, vector<32x128xbf16>
    %cst_82 = arith.constant dense<0.000000e+00> : vector<8x128xf32>
    %137 = tpu.matmul %135, %136, %cst_82 {dimension_numbers = #tpu.dot_dimension_numbers<[1], [0], [0], [1], [0, 0, 1, 1], [], []>} : vector<8x32xbf16>, vector<32x128xbf16>, vector<8x128xf32> -> vector<8x128xf32>
    %138 = arith.addf %133, %137 : vector<8x128xf32>
    %c8_i32_83 = arith.constant 8 : i32
    %139 = arith.addi %129, %c8_i32_83 : i32
    %140 = tpu.assume_multiple %139, 8 : i32
    %141 = arith.index_cast %140 : i32 to index
    %c0_84 = arith.constant 0 : index
    %142 = vector.load %arg8[%141, %c0_84] : memref<128x128xf32, #tpu.memory_space<vmem>>, vector<8x128xf32>
    %c0_85 = arith.constant 0 : index
    %c0_86 = arith.constant 0 : index
    %143 = vector.load %arg11[%c0_85, %c0_86] : memref<8x32xf32, #tpu.memory_space<vmem>>, vector<8x32xf32>
    %144 = arith.truncf %143 : vector<8x32xf32> to vector<8x32xbf16>
    %c0_87 = arith.constant 0 : index
    %c0_88 = arith.constant 0 : index
    %145 = vector.load %arg3[%c0_87, %c0_88] : memref<32x128xbf16, #tpu.memory_space<vmem>>, vector<32x128xbf16>
    %cst_89 = arith.constant dense<0.000000e+00> : vector<8x128xf32>
    %146 = tpu.matmul %144, %145, %cst_89 {dimension_numbers = #tpu.dot_dimension_numbers<[1], [0], [0], [1], [0, 0, 1, 1], [], []>} : vector<8x32xbf16>, vector<32x128xbf16>, vector<8x128xf32> -> vector<8x128xf32>
    %147 = arith.addf %142, %146 : vector<8x128xf32>
    %148 = vector.extract_strided_slice %138 {offsets = [0, 0], sizes = [8, 96], strides = [1, 1]} : vector<8x128xf32> to vector<8x96xf32>
    %149 = arith.negf %148 : vector<8x96xf32>
    %150 = math.exp %149 : vector<8x96xf32>
    %cst_90 = arith.constant 1.000000e+00 : f32
    %151 = vector.broadcast %cst_90 : f32 to vector<8x96xf32>
    %152 = arith.addf %151, %150 : vector<8x96xf32>
    %153 = arith.divf %151, %152 : vector<8x96xf32>
    %154 = vector.extract_strided_slice %153 {offsets = [0, 0], sizes = [8, 32], strides = [1, 1]} : vector<8x96xf32> to vector<8x32xf32>
    %155 = vector.extract_strided_slice %153 {offsets = [0, 32], sizes = [8, 32], strides = [1, 1]} : vector<8x96xf32> to vector<8x32xf32>
    %156 = vector.extract_strided_slice %153 {offsets = [0, 64], sizes = [8, 32], strides = [1, 1]} : vector<8x96xf32> to vector<8x32xf32>
    %157 = vector.extract_strided_slice %138 {offsets = [0, 96], sizes = [8, 32], strides = [1, 1]} : vector<8x128xf32> to vector<8x32xf32>
    %158 = math.tanh %157 : vector<8x32xf32>
    %c0_91 = arith.constant 0 : index
    %c0_92 = arith.constant 0 : index
    %159 = vector.load %arg10[%c0_91, %c0_92] : memref<8x32xf32, #tpu.memory_space<vmem>>, vector<8x32xf32>
    %160 = arith.mulf %155, %159 : vector<8x32xf32>
    %161 = arith.mulf %154, %158 : vector<8x32xf32>
    %162 = arith.addf %160, %161 : vector<8x32xf32>
    %c0_93 = arith.constant 0 : index
    %c0_94 = arith.constant 0 : index
    %163 = vector.load %arg10[%c0_93, %c0_94] : memref<8x32xf32, #tpu.memory_space<vmem>>, vector<8x32xf32>
    tpu.vector_store %arg10[%c0_93, %c0_94], %162 {strides = array<i32>} : memref<8x32xf32, #tpu.memory_space<vmem>>, vector<8x32xf32>,
    %164 = math.tanh %162 : vector<8x32xf32>
    %165 = arith.mulf %156, %164 : vector<8x32xf32>
    %c0_95 = arith.constant 0 : index
    %c0_96 = arith.constant 0 : index
    %166 = vector.load %arg9[%c0_95, %c0_96] : memref<8x32xf32, #tpu.memory_space<vmem>>, vector<8x32xf32>
    tpu.vector_store %arg9[%c0_95, %c0_96], %165 {strides = array<i32>} : memref<8x32xf32, #tpu.memory_space<vmem>>, vector<8x32xf32>,
    %167 = vector.extract_strided_slice %147 {offsets = [0, 0], sizes = [8, 96], strides = [1, 1]} : vector<8x128xf32> to vector<8x96xf32>
    %168 = arith.negf %167 : vector<8x96xf32>
    %169 = math.exp %168 : vector<8x96xf32>
    %cst_97 = arith.constant 1.000000e+00 : f32
    %170 = vector.broadcast %cst_97 : f32 to vector<8x96xf32>
    %171 = arith.addf %170, %169 : vector<8x96xf32>
    %172 = arith.divf %170, %171 : vector<8x96xf32>
    %173 = vector.extract_strided_slice %172 {offsets = [0, 0], sizes = [8, 32], strides = [1, 1]} : vector<8x96xf32> to vector<8x32xf32>
    %174 = vector.extract_strided_slice %172 {offsets = [0, 32], sizes = [8, 32], strides = [1, 1]} : vector<8x96xf32> to vector<8x32xf32>
    %175 = vector.extract_strided_slice %172 {offsets = [0, 64], sizes = [8, 32], strides = [1, 1]} : vector<8x96xf32> to vector<8x32xf32>
    %176 = vector.extract_strided_slice %147 {offsets = [0, 96], sizes = [8, 32], strides = [1, 1]} : vector<8x128xf32> to vector<8x32xf32>
    %177 = math.tanh %176 : vector<8x32xf32>
    %c0_98 = arith.constant 0 : index
    %c0_99 = arith.constant 0 : index
    %178 = vector.load %arg12[%c0_98, %c0_99] : memref<8x32xf32, #tpu.memory_space<vmem>>, vector<8x32xf32>
    %179 = arith.mulf %174, %178 : vector<8x32xf32>
    %180 = arith.mulf %173, %177 : vector<8x32xf32>
    %181 = arith.addf %179, %180 : vector<8x32xf32>
    %c0_100 = arith.constant 0 : index
    %c0_101 = arith.constant 0 : index
    %182 = vector.load %arg12[%c0_100, %c0_101] : memref<8x32xf32, #tpu.memory_space<vmem>>, vector<8x32xf32>
    tpu.vector_store %arg12[%c0_100, %c0_101], %181 {strides = array<i32>} : memref<8x32xf32, #tpu.memory_space<vmem>>, vector<8x32xf32>,
    %183 = math.tanh %181 : vector<8x32xf32>
    %184 = arith.mulf %175, %183 : vector<8x32xf32>
    %c0_102 = arith.constant 0 : index
    %c0_103 = arith.constant 0 : index
    %185 = vector.load %arg11[%c0_102, %c0_103] : memref<8x32xf32, #tpu.memory_space<vmem>>, vector<8x32xf32>
    tpu.vector_store %arg11[%c0_102, %c0_103], %184 {strides = array<i32>} : memref<8x32xf32, #tpu.memory_space<vmem>>, vector<8x32xf32>,
    %c3_i32 = arith.constant 3 : i32
    %c16_i32_104 = arith.constant 16 : i32
    %186 = arith.muli %c3_i32, %c16_i32_104 : i32
    %c0_i32_105 = arith.constant 0 : i32
    %187 = arith.addi %186, %c0_i32_105 : i32
    %188 = tpu.assume_multiple %187, 8 : i32
    %189 = arith.index_cast %188 : i32 to index
    %c0_106 = arith.constant 0 : index
    %190 = vector.load %arg8[%189, %c0_106] : memref<128x128xf32, #tpu.memory_space<vmem>>, vector<8x128xf32>
    %c0_107 = arith.constant 0 : index
    %c0_108 = arith.constant 0 : index
    %191 = vector.load %arg9[%c0_107, %c0_108] : memref<8x32xf32, #tpu.memory_space<vmem>>, vector<8x32xf32>
    %192 = arith.truncf %191 : vector<8x32xf32> to vector<8x32xbf16>
    %c0_109 = arith.constant 0 : index
    %c0_110 = arith.constant 0 : index
    %193 = vector.load %arg3[%c0_109, %c0_110] : memref<32x128xbf16, #tpu.memory_space<vmem>>, vector<32x128xbf16>
    %cst_111 = arith.constant dense<0.000000e+00> : vector<8x128xf32>
    %194 = tpu.matmul %192, %193, %cst_111 {dimension_numbers = #tpu.dot_dimension_numbers<[1], [0], [0], [1], [0, 0, 1, 1], [], []>} : vector<8x32xbf16>, vector<32x128xbf16>, vector<8x128xf32> -> vector<8x128xf32>
    %195 = arith.addf %190, %194 : vector<8x128xf32>
    %c8_i32_112 = arith.constant 8 : i32
    %196 = arith.addi %186, %c8_i32_112 : i32
    %197 = tpu.assume_multiple %196, 8 : i32
    %198 = arith.index_cast %197 : i32 to index
    %c0_113 = arith.constant 0 : index
    %199 = vector.load %arg8[%198, %c0_113] : memref<128x128xf32, #tpu.memory_space<vmem>>, vector<8x128xf32>
    %c0_114 = arith.constant 0 : index
    %c0_115 = arith.constant 0 : index
    %200 = vector.load %arg11[%c0_114, %c0_115] : memref<8x32xf32, #tpu.memory_space<vmem>>, vector<8x32xf32>
    %201 = arith.truncf %200 : vector<8x32xf32> to vector<8x32xbf16>
    %c0_116 = arith.constant 0 : index
    %c0_117 = arith.constant 0 : index
    %202 = vector.load %arg3[%c0_116, %c0_117] : memref<32x128xbf16, #tpu.memory_space<vmem>>, vector<32x128xbf16>
    %cst_118 = arith.constant dense<0.000000e+00> : vector<8x128xf32>
    %203 = tpu.matmul %201, %202, %cst_118 {dimension_numbers = #tpu.dot_dimension_numbers<[1], [0], [0], [1], [0, 0, 1, 1], [], []>} : vector<8x32xbf16>, vector<32x128xbf16>, vector<8x128xf32> -> vector<8x128xf32>
    %204 = arith.addf %199, %203 : vector<8x128xf32>
    %205 = vector.extract_strided_slice %195 {offsets = [0, 0], sizes = [8, 96], strides = [1, 1]} : vector<8x128xf32> to vector<8x96xf32>
    %206 = arith.negf %205 : vector<8x96xf32>
    %207 = math.exp %206 : vector<8x96xf32>
    %cst_119 = arith.constant 1.000000e+00 : f32
    %208 = vector.broadcast %cst_119 : f32 to vector<8x96xf32>
    %209 = arith.addf %208, %207 : vector<8x96xf32>
    %210 = arith.divf %208, %209 : vector<8x96xf32>
    %211 = vector.extract_strided_slice %210 {offsets = [0, 0], sizes = [8, 32], strides = [1, 1]} : vector<8x96xf32> to vector<8x32xf32>
    %212 = vector.extract_strided_slice %210 {offsets = [0, 32], sizes = [8, 32], strides = [1, 1]} : vector<8x96xf32> to vector<8x32xf32>
    %213 = vector.extract_strided_slice %210 {offsets = [0, 64], sizes = [8, 32], strides = [1, 1]} : vector<8x96xf32> to vector<8x32xf32>
    %214 = vector.extract_strided_slice %195 {offsets = [0, 96], sizes = [8, 32], strides = [1, 1]} : vector<8x128xf32> to vector<8x32xf32>
    %215 = math.tanh %214 : vector<8x32xf32>
    %c0_120 = arith.constant 0 : index
    %c0_121 = arith.constant 0 : index
    %216 = vector.load %arg10[%c0_120, %c0_121] : memref<8x32xf32, #tpu.memory_space<vmem>>, vector<8x32xf32>
    %217 = arith.mulf %212, %216 : vector<8x32xf32>
    %218 = arith.mulf %211, %215 : vector<8x32xf32>
    %219 = arith.addf %217, %218 : vector<8x32xf32>
    %c0_122 = arith.constant 0 : index
    %c0_123 = arith.constant 0 : index
    %220 = vector.load %arg10[%c0_122, %c0_123] : memref<8x32xf32, #tpu.memory_space<vmem>>, vector<8x32xf32>
    tpu.vector_store %arg10[%c0_122, %c0_123], %219 {strides = array<i32>} : memref<8x32xf32, #tpu.memory_space<vmem>>, vector<8x32xf32>,
    %221 = math.tanh %219 : vector<8x32xf32>
    %222 = arith.mulf %213, %221 : vector<8x32xf32>
    %c0_124 = arith.constant 0 : index
    %c0_125 = arith.constant 0 : index
    %223 = vector.load %arg9[%c0_124, %c0_125] : memref<8x32xf32, #tpu.memory_space<vmem>>, vector<8x32xf32>
    tpu.vector_store %arg9[%c0_124, %c0_125], %222 {strides = array<i32>} : memref<8x32xf32, #tpu.memory_space<vmem>>, vector<8x32xf32>,
    %224 = vector.extract_strided_slice %204 {offsets = [0, 0], sizes = [8, 96], strides = [1, 1]} : vector<8x128xf32> to vector<8x96xf32>
    %225 = arith.negf %224 : vector<8x96xf32>
    %226 = math.exp %225 : vector<8x96xf32>
    %cst_126 = arith.constant 1.000000e+00 : f32
    %227 = vector.broadcast %cst_126 : f32 to vector<8x96xf32>
    %228 = arith.addf %227, %226 : vector<8x96xf32>
    %229 = arith.divf %227, %228 : vector<8x96xf32>
    %230 = vector.extract_strided_slice %229 {offsets = [0, 0], sizes = [8, 32], strides = [1, 1]} : vector<8x96xf32> to vector<8x32xf32>
    %231 = vector.extract_strided_slice %229 {offsets = [0, 32], sizes = [8, 32], strides = [1, 1]} : vector<8x96xf32> to vector<8x32xf32>
    %232 = vector.extract_strided_slice %229 {offsets = [0, 64], sizes = [8, 32], strides = [1, 1]} : vector<8x96xf32> to vector<8x32xf32>
    %233 = vector.extract_strided_slice %204 {offsets = [0, 96], sizes = [8, 32], strides = [1, 1]} : vector<8x128xf32> to vector<8x32xf32>
    %234 = math.tanh %233 : vector<8x32xf32>
    %c0_127 = arith.constant 0 : index
    %c0_128 = arith.constant 0 : index
    %235 = vector.load %arg12[%c0_127, %c0_128] : memref<8x32xf32, #tpu.memory_space<vmem>>, vector<8x32xf32>
    %236 = arith.mulf %231, %235 : vector<8x32xf32>
    %237 = arith.mulf %230, %234 : vector<8x32xf32>
    %238 = arith.addf %236, %237 : vector<8x32xf32>
    %c0_129 = arith.constant 0 : index
    %c0_130 = arith.constant 0 : index
    %239 = vector.load %arg12[%c0_129, %c0_130] : memref<8x32xf32, #tpu.memory_space<vmem>>, vector<8x32xf32>
    tpu.vector_store %arg12[%c0_129, %c0_130], %238 {strides = array<i32>} : memref<8x32xf32, #tpu.memory_space<vmem>>, vector<8x32xf32>,
    %240 = math.tanh %238 : vector<8x32xf32>
    %241 = arith.mulf %232, %240 : vector<8x32xf32>
    %c0_131 = arith.constant 0 : index
    %c0_132 = arith.constant 0 : index
    %242 = vector.load %arg11[%c0_131, %c0_132] : memref<8x32xf32, #tpu.memory_space<vmem>>, vector<8x32xf32>
    tpu.vector_store %arg11[%c0_131, %c0_132], %241 {strides = array<i32>} : memref<8x32xf32, #tpu.memory_space<vmem>>, vector<8x32xf32>,
    %c4_i32 = arith.constant 4 : i32
    %c16_i32_133 = arith.constant 16 : i32
    %243 = arith.muli %c4_i32, %c16_i32_133 : i32
    %c0_i32_134 = arith.constant 0 : i32
    %244 = arith.addi %243, %c0_i32_134 : i32
    %245 = tpu.assume_multiple %244, 8 : i32
    %246 = arith.index_cast %245 : i32 to index
    %c0_135 = arith.constant 0 : index
    %247 = vector.load %arg8[%246, %c0_135] : memref<128x128xf32, #tpu.memory_space<vmem>>, vector<8x128xf32>
    %c0_136 = arith.constant 0 : index
    %c0_137 = arith.constant 0 : index
    %248 = vector.load %arg9[%c0_136, %c0_137] : memref<8x32xf32, #tpu.memory_space<vmem>>, vector<8x32xf32>
    %249 = arith.truncf %248 : vector<8x32xf32> to vector<8x32xbf16>
    %c0_138 = arith.constant 0 : index
    %c0_139 = arith.constant 0 : index
    %250 = vector.load %arg3[%c0_138, %c0_139] : memref<32x128xbf16, #tpu.memory_space<vmem>>, vector<32x128xbf16>
    %cst_140 = arith.constant dense<0.000000e+00> : vector<8x128xf32>
    %251 = tpu.matmul %249, %250, %cst_140 {dimension_numbers = #tpu.dot_dimension_numbers<[1], [0], [0], [1], [0, 0, 1, 1], [], []>} : vector<8x32xbf16>, vector<32x128xbf16>, vector<8x128xf32> -> vector<8x128xf32>
    %252 = arith.addf %247, %251 : vector<8x128xf32>
    %c8_i32_141 = arith.constant 8 : i32
    %253 = arith.addi %243, %c8_i32_141 : i32
    %254 = tpu.assume_multiple %253, 8 : i32
    %255 = arith.index_cast %254 : i32 to index
    %c0_142 = arith.constant 0 : index
    %256 = vector.load %arg8[%255, %c0_142] : memref<128x128xf32, #tpu.memory_space<vmem>>, vector<8x128xf32>
    %c0_143 = arith.constant 0 : index
    %c0_144 = arith.constant 0 : index
    %257 = vector.load %arg11[%c0_143, %c0_144] : memref<8x32xf32, #tpu.memory_space<vmem>>, vector<8x32xf32>
    %258 = arith.truncf %257 : vector<8x32xf32> to vector<8x32xbf16>
    %c0_145 = arith.constant 0 : index
    %c0_146 = arith.constant 0 : index
    %259 = vector.load %arg3[%c0_145, %c0_146] : memref<32x128xbf16, #tpu.memory_space<vmem>>, vector<32x128xbf16>
    %cst_147 = arith.constant dense<0.000000e+00> : vector<8x128xf32>
    %260 = tpu.matmul %258, %259, %cst_147 {dimension_numbers = #tpu.dot_dimension_numbers<[1], [0], [0], [1], [0, 0, 1, 1], [], []>} : vector<8x32xbf16>, vector<32x128xbf16>, vector<8x128xf32> -> vector<8x128xf32>
    %261 = arith.addf %256, %260 : vector<8x128xf32>
    %262 = vector.extract_strided_slice %252 {offsets = [0, 0], sizes = [8, 96], strides = [1, 1]} : vector<8x128xf32> to vector<8x96xf32>
    %263 = arith.negf %262 : vector<8x96xf32>
    %264 = math.exp %263 : vector<8x96xf32>
    %cst_148 = arith.constant 1.000000e+00 : f32
    %265 = vector.broadcast %cst_148 : f32 to vector<8x96xf32>
    %266 = arith.addf %265, %264 : vector<8x96xf32>
    %267 = arith.divf %265, %266 : vector<8x96xf32>
    %268 = vector.extract_strided_slice %267 {offsets = [0, 0], sizes = [8, 32], strides = [1, 1]} : vector<8x96xf32> to vector<8x32xf32>
    %269 = vector.extract_strided_slice %267 {offsets = [0, 32], sizes = [8, 32], strides = [1, 1]} : vector<8x96xf32> to vector<8x32xf32>
    %270 = vector.extract_strided_slice %267 {offsets = [0, 64], sizes = [8, 32], strides = [1, 1]} : vector<8x96xf32> to vector<8x32xf32>
    %271 = vector.extract_strided_slice %252 {offsets = [0, 96], sizes = [8, 32], strides = [1, 1]} : vector<8x128xf32> to vector<8x32xf32>
    %272 = math.tanh %271 : vector<8x32xf32>
    %c0_149 = arith.constant 0 : index
    %c0_150 = arith.constant 0 : index
    %273 = vector.load %arg10[%c0_149, %c0_150] : memref<8x32xf32, #tpu.memory_space<vmem>>, vector<8x32xf32>
    %274 = arith.mulf %269, %273 : vector<8x32xf32>
    %275 = arith.mulf %268, %272 : vector<8x32xf32>
    %276 = arith.addf %274, %275 : vector<8x32xf32>
    %c0_151 = arith.constant 0 : index
    %c0_152 = arith.constant 0 : index
    %277 = vector.load %arg10[%c0_151, %c0_152] : memref<8x32xf32, #tpu.memory_space<vmem>>, vector<8x32xf32>
    tpu.vector_store %arg10[%c0_151, %c0_152], %276 {strides = array<i32>} : memref<8x32xf32, #tpu.memory_space<vmem>>, vector<8x32xf32>,
    %278 = math.tanh %276 : vector<8x32xf32>
    %279 = arith.mulf %270, %278 : vector<8x32xf32>
    %c0_153 = arith.constant 0 : index
    %c0_154 = arith.constant 0 : index
    %280 = vector.load %arg9[%c0_153, %c0_154] : memref<8x32xf32, #tpu.memory_space<vmem>>, vector<8x32xf32>
    tpu.vector_store %arg9[%c0_153, %c0_154], %279 {strides = array<i32>} : memref<8x32xf32, #tpu.memory_space<vmem>>, vector<8x32xf32>,
    %281 = vector.extract_strided_slice %261 {offsets = [0, 0], sizes = [8, 96], strides = [1, 1]} : vector<8x128xf32> to vector<8x96xf32>
    %282 = arith.negf %281 : vector<8x96xf32>
    %283 = math.exp %282 : vector<8x96xf32>
    %cst_155 = arith.constant 1.000000e+00 : f32
    %284 = vector.broadcast %cst_155 : f32 to vector<8x96xf32>
    %285 = arith.addf %284, %283 : vector<8x96xf32>
    %286 = arith.divf %284, %285 : vector<8x96xf32>
    %287 = vector.extract_strided_slice %286 {offsets = [0, 0], sizes = [8, 32], strides = [1, 1]} : vector<8x96xf32> to vector<8x32xf32>
    %288 = vector.extract_strided_slice %286 {offsets = [0, 32], sizes = [8, 32], strides = [1, 1]} : vector<8x96xf32> to vector<8x32xf32>
    %289 = vector.extract_strided_slice %286 {offsets = [0, 64], sizes = [8, 32], strides = [1, 1]} : vector<8x96xf32> to vector<8x32xf32>
    %290 = vector.extract_strided_slice %261 {offsets = [0, 96], sizes = [8, 32], strides = [1, 1]} : vector<8x128xf32> to vector<8x32xf32>
    %291 = math.tanh %290 : vector<8x32xf32>
    %c0_156 = arith.constant 0 : index
    %c0_157 = arith.constant 0 : index
    %292 = vector.load %arg12[%c0_156, %c0_157] : memref<8x32xf32, #tpu.memory_space<vmem>>, vector<8x32xf32>
    %293 = arith.mulf %288, %292 : vector<8x32xf32>
    %294 = arith.mulf %287, %291 : vector<8x32xf32>
    %295 = arith.addf %293, %294 : vector<8x32xf32>
    %c0_158 = arith.constant 0 : index
    %c0_159 = arith.constant 0 : index
    %296 = vector.load %arg12[%c0_158, %c0_159] : memref<8x32xf32, #tpu.memory_space<vmem>>, vector<8x32xf32>
    tpu.vector_store %arg12[%c0_158, %c0_159], %295 {strides = array<i32>} : memref<8x32xf32, #tpu.memory_space<vmem>>, vector<8x32xf32>,
    %297 = math.tanh %295 : vector<8x32xf32>
    %298 = arith.mulf %289, %297 : vector<8x32xf32>
    %c0_160 = arith.constant 0 : index
    %c0_161 = arith.constant 0 : index
    %299 = vector.load %arg11[%c0_160, %c0_161] : memref<8x32xf32, #tpu.memory_space<vmem>>, vector<8x32xf32>
    tpu.vector_store %arg11[%c0_160, %c0_161], %298 {strides = array<i32>} : memref<8x32xf32, #tpu.memory_space<vmem>>, vector<8x32xf32>,
    %c5_i32 = arith.constant 5 : i32
    %c16_i32_162 = arith.constant 16 : i32
    %300 = arith.muli %c5_i32, %c16_i32_162 : i32
    %c0_i32_163 = arith.constant 0 : i32
    %301 = arith.addi %300, %c0_i32_163 : i32
    %302 = tpu.assume_multiple %301, 8 : i32
    %303 = arith.index_cast %302 : i32 to index
    %c0_164 = arith.constant 0 : index
    %304 = vector.load %arg8[%303, %c0_164] : memref<128x128xf32, #tpu.memory_space<vmem>>, vector<8x128xf32>
    %c0_165 = arith.constant 0 : index
    %c0_166 = arith.constant 0 : index
    %305 = vector.load %arg9[%c0_165, %c0_166] : memref<8x32xf32, #tpu.memory_space<vmem>>, vector<8x32xf32>
    %306 = arith.truncf %305 : vector<8x32xf32> to vector<8x32xbf16>
    %c0_167 = arith.constant 0 : index
    %c0_168 = arith.constant 0 : index
    %307 = vector.load %arg3[%c0_167, %c0_168] : memref<32x128xbf16, #tpu.memory_space<vmem>>, vector<32x128xbf16>
    %cst_169 = arith.constant dense<0.000000e+00> : vector<8x128xf32>
    %308 = tpu.matmul %306, %307, %cst_169 {dimension_numbers = #tpu.dot_dimension_numbers<[1], [0], [0], [1], [0, 0, 1, 1], [], []>} : vector<8x32xbf16>, vector<32x128xbf16>, vector<8x128xf32> -> vector<8x128xf32>
    %309 = arith.addf %304, %308 : vector<8x128xf32>
    %c8_i32_170 = arith.constant 8 : i32
    %310 = arith.addi %300, %c8_i32_170 : i32
    %311 = tpu.assume_multiple %310, 8 : i32
    %312 = arith.index_cast %311 : i32 to index
    %c0_171 = arith.constant 0 : index
    %313 = vector.load %arg8[%312, %c0_171] : memref<128x128xf32, #tpu.memory_space<vmem>>, vector<8x128xf32>
    %c0_172 = arith.constant 0 : index
    %c0_173 = arith.constant 0 : index
    %314 = vector.load %arg11[%c0_172, %c0_173] : memref<8x32xf32, #tpu.memory_space<vmem>>, vector<8x32xf32>
    %315 = arith.truncf %314 : vector<8x32xf32> to vector<8x32xbf16>
    %c0_174 = arith.constant 0 : index
    %c0_175 = arith.constant 0 : index
    %316 = vector.load %arg3[%c0_174, %c0_175] : memref<32x128xbf16, #tpu.memory_space<vmem>>, vector<32x128xbf16>
    %cst_176 = arith.constant dense<0.000000e+00> : vector<8x128xf32>
    %317 = tpu.matmul %315, %316, %cst_176 {dimension_numbers = #tpu.dot_dimension_numbers<[1], [0], [0], [1], [0, 0, 1, 1], [], []>} : vector<8x32xbf16>, vector<32x128xbf16>, vector<8x128xf32> -> vector<8x128xf32>
    %318 = arith.addf %313, %317 : vector<8x128xf32>
    %319 = vector.extract_strided_slice %309 {offsets = [0, 0], sizes = [8, 96], strides = [1, 1]} : vector<8x128xf32> to vector<8x96xf32>
    %320 = arith.negf %319 : vector<8x96xf32>
    %321 = math.exp %320 : vector<8x96xf32>
    %cst_177 = arith.constant 1.000000e+00 : f32
    %322 = vector.broadcast %cst_177 : f32 to vector<8x96xf32>
    %323 = arith.addf %322, %321 : vector<8x96xf32>
    %324 = arith.divf %322, %323 : vector<8x96xf32>
    %325 = vector.extract_strided_slice %324 {offsets = [0, 0], sizes = [8, 32], strides = [1, 1]} : vector<8x96xf32> to vector<8x32xf32>
    %326 = vector.extract_strided_slice %324 {offsets = [0, 32], sizes = [8, 32], strides = [1, 1]} : vector<8x96xf32> to vector<8x32xf32>
    %327 = vector.extract_strided_slice %324 {offsets = [0, 64], sizes = [8, 32], strides = [1, 1]} : vector<8x96xf32> to vector<8x32xf32>
    %328 = vector.extract_strided_slice %309 {offsets = [0, 96], sizes = [8, 32], strides = [1, 1]} : vector<8x128xf32> to vector<8x32xf32>
    %329 = math.tanh %328 : vector<8x32xf32>
    %c0_178 = arith.constant 0 : index
    %c0_179 = arith.constant 0 : index
    %330 = vector.load %arg10[%c0_178, %c0_179] : memref<8x32xf32, #tpu.memory_space<vmem>>, vector<8x32xf32>
    %331 = arith.mulf %326, %330 : vector<8x32xf32>
    %332 = arith.mulf %325, %329 : vector<8x32xf32>
    %333 = arith.addf %331, %332 : vector<8x32xf32>
    %c0_180 = arith.constant 0 : index
    %c0_181 = arith.constant 0 : index
    %334 = vector.load %arg10[%c0_180, %c0_181] : memref<8x32xf32, #tpu.memory_space<vmem>>, vector<8x32xf32>
    tpu.vector_store %arg10[%c0_180, %c0_181], %333 {strides = array<i32>} : memref<8x32xf32, #tpu.memory_space<vmem>>, vector<8x32xf32>,
    %335 = math.tanh %333 : vector<8x32xf32>
    %336 = arith.mulf %327, %335 : vector<8x32xf32>
    %c0_182 = arith.constant 0 : index
    %c0_183 = arith.constant 0 : index
    %337 = vector.load %arg9[%c0_182, %c0_183] : memref<8x32xf32, #tpu.memory_space<vmem>>, vector<8x32xf32>
    tpu.vector_store %arg9[%c0_182, %c0_183], %336 {strides = array<i32>} : memref<8x32xf32, #tpu.memory_space<vmem>>, vector<8x32xf32>,
    %338 = vector.extract_strided_slice %318 {offsets = [0, 0], sizes = [8, 96], strides = [1, 1]} : vector<8x128xf32> to vector<8x96xf32>
    %339 = arith.negf %338 : vector<8x96xf32>
    %340 = math.exp %339 : vector<8x96xf32>
    %cst_184 = arith.constant 1.000000e+00 : f32
    %341 = vector.broadcast %cst_184 : f32 to vector<8x96xf32>
    %342 = arith.addf %341, %340 : vector<8x96xf32>
    %343 = arith.divf %341, %342 : vector<8x96xf32>
    %344 = vector.extract_strided_slice %343 {offsets = [0, 0], sizes = [8, 32], strides = [1, 1]} : vector<8x96xf32> to vector<8x32xf32>
    %345 = vector.extract_strided_slice %343 {offsets = [0, 32], sizes = [8, 32], strides = [1, 1]} : vector<8x96xf32> to vector<8x32xf32>
    %346 = vector.extract_strided_slice %343 {offsets = [0, 64], sizes = [8, 32], strides = [1, 1]} : vector<8x96xf32> to vector<8x32xf32>
    %347 = vector.extract_strided_slice %318 {offsets = [0, 96], sizes = [8, 32], strides = [1, 1]} : vector<8x128xf32> to vector<8x32xf32>
    %348 = math.tanh %347 : vector<8x32xf32>
    %c0_185 = arith.constant 0 : index
    %c0_186 = arith.constant 0 : index
    %349 = vector.load %arg12[%c0_185, %c0_186] : memref<8x32xf32, #tpu.memory_space<vmem>>, vector<8x32xf32>
    %350 = arith.mulf %345, %349 : vector<8x32xf32>
    %351 = arith.mulf %344, %348 : vector<8x32xf32>
    %352 = arith.addf %350, %351 : vector<8x32xf32>
    %c0_187 = arith.constant 0 : index
    %c0_188 = arith.constant 0 : index
    %353 = vector.load %arg12[%c0_187, %c0_188] : memref<8x32xf32, #tpu.memory_space<vmem>>, vector<8x32xf32>
    tpu.vector_store %arg12[%c0_187, %c0_188], %352 {strides = array<i32>} : memref<8x32xf32, #tpu.memory_space<vmem>>, vector<8x32xf32>,
    %354 = math.tanh %352 : vector<8x32xf32>
    %355 = arith.mulf %346, %354 : vector<8x32xf32>
    %c0_189 = arith.constant 0 : index
    %c0_190 = arith.constant 0 : index
    %356 = vector.load %arg11[%c0_189, %c0_190] : memref<8x32xf32, #tpu.memory_space<vmem>>, vector<8x32xf32>
    tpu.vector_store %arg11[%c0_189, %c0_190], %355 {strides = array<i32>} : memref<8x32xf32, #tpu.memory_space<vmem>>, vector<8x32xf32>,
    %c6_i32 = arith.constant 6 : i32
    %c16_i32_191 = arith.constant 16 : i32
    %357 = arith.muli %c6_i32, %c16_i32_191 : i32
    %c0_i32_192 = arith.constant 0 : i32
    %358 = arith.addi %357, %c0_i32_192 : i32
    %359 = tpu.assume_multiple %358, 8 : i32
    %360 = arith.index_cast %359 : i32 to index
    %c0_193 = arith.constant 0 : index
    %361 = vector.load %arg8[%360, %c0_193] : memref<128x128xf32, #tpu.memory_space<vmem>>, vector<8x128xf32>
    %c0_194 = arith.constant 0 : index
    %c0_195 = arith.constant 0 : index
    %362 = vector.load %arg9[%c0_194, %c0_195] : memref<8x32xf32, #tpu.memory_space<vmem>>, vector<8x32xf32>
    %363 = arith.truncf %362 : vector<8x32xf32> to vector<8x32xbf16>
    %c0_196 = arith.constant 0 : index
    %c0_197 = arith.constant 0 : index
    %364 = vector.load %arg3[%c0_196, %c0_197] : memref<32x128xbf16, #tpu.memory_space<vmem>>, vector<32x128xbf16>
    %cst_198 = arith.constant dense<0.000000e+00> : vector<8x128xf32>
    %365 = tpu.matmul %363, %364, %cst_198 {dimension_numbers = #tpu.dot_dimension_numbers<[1], [0], [0], [1], [0, 0, 1, 1], [], []>} : vector<8x32xbf16>, vector<32x128xbf16>, vector<8x128xf32> -> vector<8x128xf32>
    %366 = arith.addf %361, %365 : vector<8x128xf32>
    %c8_i32_199 = arith.constant 8 : i32
    %367 = arith.addi %357, %c8_i32_199 : i32
    %368 = tpu.assume_multiple %367, 8 : i32
    %369 = arith.index_cast %368 : i32 to index
    %c0_200 = arith.constant 0 : index
    %370 = vector.load %arg8[%369, %c0_200] : memref<128x128xf32, #tpu.memory_space<vmem>>, vector<8x128xf32>
    %c0_201 = arith.constant 0 : index
    %c0_202 = arith.constant 0 : index
    %371 = vector.load %arg11[%c0_201, %c0_202] : memref<8x32xf32, #tpu.memory_space<vmem>>, vector<8x32xf32>
    %372 = arith.truncf %371 : vector<8x32xf32> to vector<8x32xbf16>
    %c0_203 = arith.constant 0 : index
    %c0_204 = arith.constant 0 : index
    %373 = vector.load %arg3[%c0_203, %c0_204] : memref<32x128xbf16, #tpu.memory_space<vmem>>, vector<32x128xbf16>
    %cst_205 = arith.constant dense<0.000000e+00> : vector<8x128xf32>
    %374 = tpu.matmul %372, %373, %cst_205 {dimension_numbers = #tpu.dot_dimension_numbers<[1], [0], [0], [1], [0, 0, 1, 1], [], []>} : vector<8x32xbf16>, vector<32x128xbf16>, vector<8x128xf32> -> vector<8x128xf32>
    %375 = arith.addf %370, %374 : vector<8x128xf32>
    %376 = vector.extract_strided_slice %366 {offsets = [0, 0], sizes = [8, 96], strides = [1, 1]} : vector<8x128xf32> to vector<8x96xf32>
    %377 = arith.negf %376 : vector<8x96xf32>
    %378 = math.exp %377 : vector<8x96xf32>
    %cst_206 = arith.constant 1.000000e+00 : f32
    %379 = vector.broadcast %cst_206 : f32 to vector<8x96xf32>
    %380 = arith.addf %379, %378 : vector<8x96xf32>
    %381 = arith.divf %379, %380 : vector<8x96xf32>
    %382 = vector.extract_strided_slice %381 {offsets = [0, 0], sizes = [8, 32], strides = [1, 1]} : vector<8x96xf32> to vector<8x32xf32>
    %383 = vector.extract_strided_slice %381 {offsets = [0, 32], sizes = [8, 32], strides = [1, 1]} : vector<8x96xf32> to vector<8x32xf32>
    %384 = vector.extract_strided_slice %381 {offsets = [0, 64], sizes = [8, 32], strides = [1, 1]} : vector<8x96xf32> to vector<8x32xf32>
    %385 = vector.extract_strided_slice %366 {offsets = [0, 96], sizes = [8, 32], strides = [1, 1]} : vector<8x128xf32> to vector<8x32xf32>
    %386 = math.tanh %385 : vector<8x32xf32>
    %c0_207 = arith.constant 0 : index
    %c0_208 = arith.constant 0 : index
    %387 = vector.load %arg10[%c0_207, %c0_208] : memref<8x32xf32, #tpu.memory_space<vmem>>, vector<8x32xf32>
    %388 = arith.mulf %383, %387 : vector<8x32xf32>
    %389 = arith.mulf %382, %386 : vector<8x32xf32>
    %390 = arith.addf %388, %389 : vector<8x32xf32>
    %c0_209 = arith.constant 0 : index
    %c0_210 = arith.constant 0 : index
    %391 = vector.load %arg10[%c0_209, %c0_210] : memref<8x32xf32, #tpu.memory_space<vmem>>, vector<8x32xf32>
    tpu.vector_store %arg10[%c0_209, %c0_210], %390 {strides = array<i32>} : memref<8x32xf32, #tpu.memory_space<vmem>>, vector<8x32xf32>,
    %392 = math.tanh %390 : vector<8x32xf32>
    %393 = arith.mulf %384, %392 : vector<8x32xf32>
    %c0_211 = arith.constant 0 : index
    %c0_212 = arith.constant 0 : index
    %394 = vector.load %arg9[%c0_211, %c0_212] : memref<8x32xf32, #tpu.memory_space<vmem>>, vector<8x32xf32>
    tpu.vector_store %arg9[%c0_211, %c0_212], %393 {strides = array<i32>} : memref<8x32xf32, #tpu.memory_space<vmem>>, vector<8x32xf32>,
    %395 = vector.extract_strided_slice %375 {offsets = [0, 0], sizes = [8, 96], strides = [1, 1]} : vector<8x128xf32> to vector<8x96xf32>
    %396 = arith.negf %395 : vector<8x96xf32>
    %397 = math.exp %396 : vector<8x96xf32>
    %cst_213 = arith.constant 1.000000e+00 : f32
    %398 = vector.broadcast %cst_213 : f32 to vector<8x96xf32>
    %399 = arith.addf %398, %397 : vector<8x96xf32>
    %400 = arith.divf %398, %399 : vector<8x96xf32>
    %401 = vector.extract_strided_slice %400 {offsets = [0, 0], sizes = [8, 32], strides = [1, 1]} : vector<8x96xf32> to vector<8x32xf32>
    %402 = vector.extract_strided_slice %400 {offsets = [0, 32], sizes = [8, 32], strides = [1, 1]} : vector<8x96xf32> to vector<8x32xf32>
    %403 = vector.extract_strided_slice %400 {offsets = [0, 64], sizes = [8, 32], strides = [1, 1]} : vector<8x96xf32> to vector<8x32xf32>
    %404 = vector.extract_strided_slice %375 {offsets = [0, 96], sizes = [8, 32], strides = [1, 1]} : vector<8x128xf32> to vector<8x32xf32>
    %405 = math.tanh %404 : vector<8x32xf32>
    %c0_214 = arith.constant 0 : index
    %c0_215 = arith.constant 0 : index
    %406 = vector.load %arg12[%c0_214, %c0_215] : memref<8x32xf32, #tpu.memory_space<vmem>>, vector<8x32xf32>
    %407 = arith.mulf %402, %406 : vector<8x32xf32>
    %408 = arith.mulf %401, %405 : vector<8x32xf32>
    %409 = arith.addf %407, %408 : vector<8x32xf32>
    %c0_216 = arith.constant 0 : index
    %c0_217 = arith.constant 0 : index
    %410 = vector.load %arg12[%c0_216, %c0_217] : memref<8x32xf32, #tpu.memory_space<vmem>>, vector<8x32xf32>
    tpu.vector_store %arg12[%c0_216, %c0_217], %409 {strides = array<i32>} : memref<8x32xf32, #tpu.memory_space<vmem>>, vector<8x32xf32>,
    %411 = math.tanh %409 : vector<8x32xf32>
    %412 = arith.mulf %403, %411 : vector<8x32xf32>
    %c0_218 = arith.constant 0 : index
    %c0_219 = arith.constant 0 : index
    %413 = vector.load %arg11[%c0_218, %c0_219] : memref<8x32xf32, #tpu.memory_space<vmem>>, vector<8x32xf32>
    tpu.vector_store %arg11[%c0_218, %c0_219], %412 {strides = array<i32>} : memref<8x32xf32, #tpu.memory_space<vmem>>, vector<8x32xf32>,
    %c7_i32 = arith.constant 7 : i32
    %c16_i32_220 = arith.constant 16 : i32
    %414 = arith.muli %c7_i32, %c16_i32_220 : i32
    %c0_i32_221 = arith.constant 0 : i32
    %415 = arith.addi %414, %c0_i32_221 : i32
    %416 = tpu.assume_multiple %415, 8 : i32
    %417 = arith.index_cast %416 : i32 to index
    %c0_222 = arith.constant 0 : index
    %418 = vector.load %arg8[%417, %c0_222] : memref<128x128xf32, #tpu.memory_space<vmem>>, vector<8x128xf32>
    %c0_223 = arith.constant 0 : index
    %c0_224 = arith.constant 0 : index
    %419 = vector.load %arg9[%c0_223, %c0_224] : memref<8x32xf32, #tpu.memory_space<vmem>>, vector<8x32xf32>
    %420 = arith.truncf %419 : vector<8x32xf32> to vector<8x32xbf16>
    %c0_225 = arith.constant 0 : index
    %c0_226 = arith.constant 0 : index
    %421 = vector.load %arg3[%c0_225, %c0_226] : memref<32x128xbf16, #tpu.memory_space<vmem>>, vector<32x128xbf16>
    %cst_227 = arith.constant dense<0.000000e+00> : vector<8x128xf32>
    %422 = tpu.matmul %420, %421, %cst_227 {dimension_numbers = #tpu.dot_dimension_numbers<[1], [0], [0], [1], [0, 0, 1, 1], [], []>} : vector<8x32xbf16>, vector<32x128xbf16>, vector<8x128xf32> -> vector<8x128xf32>
    %423 = arith.addf %418, %422 : vector<8x128xf32>
    %c8_i32_228 = arith.constant 8 : i32
    %424 = arith.addi %414, %c8_i32_228 : i32
    %425 = tpu.assume_multiple %424, 8 : i32
    %426 = arith.index_cast %425 : i32 to index
    %c0_229 = arith.constant 0 : index
    %427 = vector.load %arg8[%426, %c0_229] : memref<128x128xf32, #tpu.memory_space<vmem>>, vector<8x128xf32>
    %c0_230 = arith.constant 0 : index
    %c0_231 = arith.constant 0 : index
    %428 = vector.load %arg11[%c0_230, %c0_231] : memref<8x32xf32, #tpu.memory_space<vmem>>, vector<8x32xf32>
    %429 = arith.truncf %428 : vector<8x32xf32> to vector<8x32xbf16>
    %c0_232 = arith.constant 0 : index
    %c0_233 = arith.constant 0 : index
    %430 = vector.load %arg3[%c0_232, %c0_233] : memref<32x128xbf16, #tpu.memory_space<vmem>>, vector<32x128xbf16>
    %cst_234 = arith.constant dense<0.000000e+00> : vector<8x128xf32>
    %431 = tpu.matmul %429, %430, %cst_234 {dimension_numbers = #tpu.dot_dimension_numbers<[1], [0], [0], [1], [0, 0, 1, 1], [], []>} : vector<8x32xbf16>, vector<32x128xbf16>, vector<8x128xf32> -> vector<8x128xf32>
    %432 = arith.addf %427, %431 : vector<8x128xf32>
    %433 = vector.extract_strided_slice %423 {offsets = [0, 0], sizes = [8, 96], strides = [1, 1]} : vector<8x128xf32> to vector<8x96xf32>
    %434 = arith.negf %433 : vector<8x96xf32>
    %435 = math.exp %434 : vector<8x96xf32>
    %cst_235 = arith.constant 1.000000e+00 : f32
    %436 = vector.broadcast %cst_235 : f32 to vector<8x96xf32>
    %437 = arith.addf %436, %435 : vector<8x96xf32>
    %438 = arith.divf %436, %437 : vector<8x96xf32>
    %439 = vector.extract_strided_slice %438 {offsets = [0, 0], sizes = [8, 32], strides = [1, 1]} : vector<8x96xf32> to vector<8x32xf32>
    %440 = vector.extract_strided_slice %438 {offsets = [0, 32], sizes = [8, 32], strides = [1, 1]} : vector<8x96xf32> to vector<8x32xf32>
    %441 = vector.extract_strided_slice %438 {offsets = [0, 64], sizes = [8, 32], strides = [1, 1]} : vector<8x96xf32> to vector<8x32xf32>
    %442 = vector.extract_strided_slice %423 {offsets = [0, 96], sizes = [8, 32], strides = [1, 1]} : vector<8x128xf32> to vector<8x32xf32>
    %443 = math.tanh %442 : vector<8x32xf32>
    %c0_236 = arith.constant 0 : index
    %c0_237 = arith.constant 0 : index
    %444 = vector.load %arg10[%c0_236, %c0_237] : memref<8x32xf32, #tpu.memory_space<vmem>>, vector<8x32xf32>
    %445 = arith.mulf %440, %444 : vector<8x32xf32>
    %446 = arith.mulf %439, %443 : vector<8x32xf32>
    %447 = arith.addf %445, %446 : vector<8x32xf32>
    %c0_238 = arith.constant 0 : index
    %c0_239 = arith.constant 0 : index
    %448 = vector.load %arg10[%c0_238, %c0_239] : memref<8x32xf32, #tpu.memory_space<vmem>>, vector<8x32xf32>
    tpu.vector_store %arg10[%c0_238, %c0_239], %447 {strides = array<i32>} : memref<8x32xf32, #tpu.memory_space<vmem>>, vector<8x32xf32>,
    %449 = math.tanh %447 : vector<8x32xf32>
    %450 = arith.mulf %441, %449 : vector<8x32xf32>
    %c0_240 = arith.constant 0 : index
    %c0_241 = arith.constant 0 : index
    %451 = vector.load %arg9[%c0_240, %c0_241] : memref<8x32xf32, #tpu.memory_space<vmem>>, vector<8x32xf32>
    tpu.vector_store %arg9[%c0_240, %c0_241], %450 {strides = array<i32>} : memref<8x32xf32, #tpu.memory_space<vmem>>, vector<8x32xf32>,
    %452 = vector.extract_strided_slice %432 {offsets = [0, 0], sizes = [8, 96], strides = [1, 1]} : vector<8x128xf32> to vector<8x96xf32>
    %453 = arith.negf %452 : vector<8x96xf32>
    %454 = math.exp %453 : vector<8x96xf32>
    %cst_242 = arith.constant 1.000000e+00 : f32
    %455 = vector.broadcast %cst_242 : f32 to vector<8x96xf32>
    %456 = arith.addf %455, %454 : vector<8x96xf32>
    %457 = arith.divf %455, %456 : vector<8x96xf32>
    %458 = vector.extract_strided_slice %457 {offsets = [0, 0], sizes = [8, 32], strides = [1, 1]} : vector<8x96xf32> to vector<8x32xf32>
    %459 = vector.extract_strided_slice %457 {offsets = [0, 32], sizes = [8, 32], strides = [1, 1]} : vector<8x96xf32> to vector<8x32xf32>
    %460 = vector.extract_strided_slice %457 {offsets = [0, 64], sizes = [8, 32], strides = [1, 1]} : vector<8x96xf32> to vector<8x32xf32>
    %461 = vector.extract_strided_slice %432 {offsets = [0, 96], sizes = [8, 32], strides = [1, 1]} : vector<8x128xf32> to vector<8x32xf32>
    %462 = math.tanh %461 : vector<8x32xf32>
    %c0_243 = arith.constant 0 : index
    %c0_244 = arith.constant 0 : index
    %463 = vector.load %arg12[%c0_243, %c0_244] : memref<8x32xf32, #tpu.memory_space<vmem>>, vector<8x32xf32>
    %464 = arith.mulf %459, %463 : vector<8x32xf32>
    %465 = arith.mulf %458, %462 : vector<8x32xf32>
    %466 = arith.addf %464, %465 : vector<8x32xf32>
    %c0_245 = arith.constant 0 : index
    %c0_246 = arith.constant 0 : index
    %467 = vector.load %arg12[%c0_245, %c0_246] : memref<8x32xf32, #tpu.memory_space<vmem>>, vector<8x32xf32>
    tpu.vector_store %arg12[%c0_245, %c0_246], %466 {strides = array<i32>} : memref<8x32xf32, #tpu.memory_space<vmem>>, vector<8x32xf32>,
    %468 = math.tanh %466 : vector<8x32xf32>
    %469 = arith.mulf %460, %468 : vector<8x32xf32>
    %c0_247 = arith.constant 0 : index
    %c0_248 = arith.constant 0 : index
    %470 = vector.load %arg11[%c0_247, %c0_248] : memref<8x32xf32, #tpu.memory_space<vmem>>, vector<8x32xf32>
    tpu.vector_store %arg11[%c0_247, %c0_248], %469 {strides = array<i32>} : memref<8x32xf32, #tpu.memory_space<vmem>>, vector<8x32xf32>,
    %c8_i32_249 = arith.constant 8 : i32
    %c0_250 = arith.constant 0 : index
    %c0_251 = arith.constant 0 : index
    %471 = vector.load %arg9[%c0_250, %c0_251] : memref<8x32xf32, #tpu.memory_space<vmem>>, vector<8x32xf32>
    %472 = arith.truncf %471 : vector<8x32xf32> to vector<8x32xbf16>
    %c0_252 = arith.constant 0 : index
    %c0_253 = arith.constant 0 : index
    %473 = vector.load %arg5[%c0_252, %c0_253] : memref<32x128xbf16, #tpu.memory_space<vmem>>, vector<32x128xbf16>
    %cst_254 = arith.constant dense<0.000000e+00> : vector<8x128xf32>
    %474 = tpu.matmul %472, %473, %cst_254 {dimension_numbers = #tpu.dot_dimension_numbers<[1], [0], [0], [1], [0, 0, 1, 1], [], []>} : vector<8x32xbf16>, vector<32x128xbf16>, vector<8x128xf32> -> vector<8x128xf32>
    %c0_255 = arith.constant 0 : index
    %c0_256 = arith.constant 0 : index
    %475 = vector.load %arg6[%c0_255, %c0_256] : memref<1x128xf32, #tpu.memory_space<vmem>>, vector<1x128xf32>
    %476 = vector.broadcast %475 : vector<1x128xf32> to vector<8x128xf32>
    %477 = arith.addf %474, %476 : vector<8x128xf32>
    %c0_257 = arith.constant 0 : index
    %c0_258 = arith.constant 0 : index
    %478 = vector.load %arg7[%c0_257, %c0_258] : memref<16x128xf32, #tpu.memory_space<vmem>>, vector<8x128xf32>
    tpu.vector_store %arg7[%c0_257, %c0_258], %477 {strides = array<i32>} : memref<16x128xf32, #tpu.memory_space<vmem>>, vector<8x128xf32>,
    %c0_259 = arith.constant 0 : index
    %c0_260 = arith.constant 0 : index
    %479 = vector.load %arg11[%c0_259, %c0_260] : memref<8x32xf32, #tpu.memory_space<vmem>>, vector<8x32xf32>
    %480 = arith.truncf %479 : vector<8x32xf32> to vector<8x32xbf16>
    %c0_261 = arith.constant 0 : index
    %c0_262 = arith.constant 0 : index
    %481 = vector.load %arg5[%c0_261, %c0_262] : memref<32x128xbf16, #tpu.memory_space<vmem>>, vector<32x128xbf16>
    %cst_263 = arith.constant dense<0.000000e+00> : vector<8x128xf32>
    %482 = tpu.matmul %480, %481, %cst_263 {dimension_numbers = #tpu.dot_dimension_numbers<[1], [0], [0], [1], [0, 0, 1, 1], [], []>} : vector<8x32xbf16>, vector<32x128xbf16>, vector<8x128xf32> -> vector<8x128xf32>
    %c0_264 = arith.constant 0 : index
    %c0_265 = arith.constant 0 : index
    %483 = vector.load %arg6[%c0_264, %c0_265] : memref<1x128xf32, #tpu.memory_space<vmem>>, vector<1x128xf32>
    %484 = vector.broadcast %483 : vector<1x128xf32> to vector<8x128xf32>
    %485 = arith.addf %482, %484 : vector<8x128xf32>
    %c8 = arith.constant 8 : index
    %c0_266 = arith.constant 0 : index
    %486 = vector.load %arg7[%c8, %c0_266] : memref<16x128xf32, #tpu.memory_space<vmem>>, vector<8x128xf32>
    tpu.vector_store %arg7[%c8, %c0_266], %485 {strides = array<i32>} : memref<16x128xf32, #tpu.memory_space<vmem>>, vector<8x128xf32>,
    return
  }
  func.func @transform_0(%arg0: i32) -> (i32, i32) {
    %c0_i32 = arith.constant 0 : i32
    %c0_i32_0 = arith.constant 0 : i32
    return %arg0, %c0_i32 : i32, i32
  }
  func.func @transform_1(%arg0: i32) -> (i32, i32) {
    %c0_i32 = arith.constant 0 : i32
    %c0_i32_0 = arith.constant 0 : i32
    %c0_i32_1 = arith.constant 0 : i32
    return %c0_i32, %c0_i32_0 : i32, i32
  }
  func.func @transform_2(%arg0: i32) -> (i32, i32) {
    %c0_i32 = arith.constant 0 : i32
    %c0_i32_0 = arith.constant 0 : i32
    %c0_i32_1 = arith.constant 0 : i32
    return %c0_i32, %c0_i32_0 : i32, i32
  }
  func.func @transform_3(%arg0: i32) -> (i32, i32) {
    %c0_i32 = arith.constant 0 : i32
    %c0_i32_0 = arith.constant 0 : i32
    %c0_i32_1 = arith.constant 0 : i32
    return %c0_i32, %c0_i32_0 : i32, i32
  }
  func.func @transform_4(%arg0: i32) -> (i32, i32) {
    %c0_i32 = arith.constant 0 : i32
    %c0_i32_0 = arith.constant 0 : i32
    %c0_i32_1 = arith.constant 0 : i32
    return %c0_i32, %c0_i32_0 : i32, i32
  }
  func.func @transform_5(%arg0: i32) -> (i32, i32) {
    %c0_i32 = arith.constant 0 : i32
    %c0_i32_0 = arith.constant 0 : i32
    %c0_i32_1 = arith.constant 0 : i32
    return %c0_i32, %c0_i32_0 : i32, i32
  }
  func.func @transform_6(%arg0: i32) -> (i32, i32) {
    %c0_i32 = arith.constant 0 : i32
    %c0_i32_0 = arith.constant 0 : i32
    return %arg0, %c0_i32 : i32, i32
  }
}

</mosaic_0001>

<llo_original>
// kernel: tpu_custom_call.1
$region0: #{tpu_custom_call.1}
  #allocation0 [shape = 'u32[]', space=smem, size = 0x4, offset = 0x4, fixed_abs, tag = 'smem constant byte address 0x4 - core index']
  #allocation1 [shape = 'u32[72,128]{1,0:T(1,128)}', space=vmem, size = 0x9000, scoped, tag = 'internal scratch']
  #allocation2 [shape = 'f32[128,128]{1,0:T(8,128)}', space=vmem, size = 0x10000, scoped, tag = 'scratch operand']
  #allocation3 [shape = 'f32[8,32]{1,0:T(8,128)}', space=vmem, size = 0x1000, scoped, tag = 'scratch operand']
  #allocation4 [shape = 'f32[8,32]{1,0:T(8,128)}', space=vmem, size = 0x1000, scoped, tag = 'scratch operand']
  #allocation5 [shape = 'f32[8,32]{1,0:T(8,128)}', space=vmem, size = 0x1000, scoped, tag = 'scratch operand']
  #allocation6 [shape = 'f32[8,32]{1,0:T(8,128)}', space=vmem, size = 0x1000, scoped, tag = 'scratch operand']
  %s0 = inlined_call_operand.vmem [shape: bf16[128,16], index: 0, kind: input, shape index: {}]
  %s1 = inlined_call_operand.vmem [shape: bf16[16,128], index: 1, kind: input, shape index: {}]
  %s2 = inlined_call_operand.vmem [shape: bf16[32,128], index: 2, kind: input, shape index: {}]
  %s3 = inlined_call_operand.vmem [shape: f32[1,128], index: 3, kind: input, shape index: {}]
  %s4 = inlined_call_operand.vmem [shape: bf16[32,128], index: 4, kind: input, shape index: {}]
  %s5 = inlined_call_operand.vmem [shape: f32[1,128], index: 5, kind: input, shape index: {}]
  %s6 = inlined_call_operand.hbm [shape: f32[16,128], index: 6, kind: output, shape index: {}]
  %s7 = sld [smem:[#allocation0]]
  $region34: #{tpu_custom_call.1} parent=0
    _
  %s9 = ssub.s32 1, %s7
  %s10 = scalar_select 0, %s9, %s7
  $region1: #{tpu_custom_call.1} parent=0
    #allocation7 [shape = 'u8[8192]{0}', space=vmem, size = 0x2000, scoped, tag = 'output window, operand 0, single buffered']
    #allocation8 [shape = 's32[1]{0}', space=sflag, size = 0x4, scoped, tag = 'scoped memory for tpu_custom_call.1']
    %11 = vsyncpa [#allocation8], 0
    // Predicated region
    $region2: #{tpu_custom_call.1} parent=1 // pred_check
      _
    $region3: #{tpu_custom_call.1} parent=1 // pred_check_branch
      %13 = sbr.rel (0) target = $region5
    $region4: #{tpu_custom_call.1} parent=1 // pred_region
      _
    $region5: #{tpu_custom_call.1} parent=1 // pred_fallthru
      _
    // Predicated region
    $region6: #{tpu_custom_call.1} parent=1 // pred_check
      _
    $region7: #{tpu_custom_call.1} parent=1 // pred_check_branch
      %15 = sbr.rel (0) target = $region9
    $region8: #{tpu_custom_call.1} parent=1 // pred_region
      _
    $region9: #{tpu_custom_call.1} parent=1 // pred_fallthru
      _
    // Predicated region
    $region10: #{tpu_custom_call.1} parent=1 // pred_check
      _
    $region11: #{tpu_custom_call.1} parent=1 // pred_check_branch
      %17 = sbr.rel (0) target = $region13
    $region12: #{tpu_custom_call.1} parent=1 // pred_region
      _
    $region13: #{tpu_custom_call.1} parent=1 // pred_fallthru
      _
    // Predicated region
    $region14: #{tpu_custom_call.1} parent=1 // pred_check
      _
    $region15: #{tpu_custom_call.1} parent=1 // pred_check_branch
      %19 = sbr.rel (0) target = $region17
    $region16: #{tpu_custom_call.1} parent=1 // pred_region
      _
    $region17: #{tpu_custom_call.1} parent=1 // pred_fallthru
      _
    // Predicated region
    $region18: #{tpu_custom_call.1} parent=1 // pred_check
      _
    $region19: #{tpu_custom_call.1} parent=1 // pred_check_branch
      %21 = sbr.rel (0) target = $region21
    $region20: #{tpu_custom_call.1} parent=1 // pred_region
      _
    $region21: #{tpu_custom_call.1} parent=1 // pred_fallthru
      _
    // Predicated region
    $region22: #{tpu_custom_call.1} parent=1 // pred_check
      _
    $region23: #{tpu_custom_call.1} parent=1 // pred_check_branch
      %23 = sbr.rel (0) target = $region25
    $region24: #{tpu_custom_call.1} parent=1 // pred_region
      _
    $region25: #{tpu_custom_call.1} parent=1 // pred_fallthru
      _
    %v25 = vld [vmem:[%s0] sm:$0xf]
    %v26 = vld [vmem:[%s0 + $0x4] sm:$0xf]
    %v27 = vld [vmem:[%s0 + $0x8] sm:$0xf]
    %v28 = vld [vmem:[%s0 + $0xc] sm:$0xf]
    %v29 = vld [vmem:[%s0 + $0x10] sm:$0xf]
    %v30 = vld [vmem:[%s0 + $0x14] sm:$0xf]
    %v31 = vld [vmem:[%s0 + $0x18] sm:$0xf]
    %v32 = vld [vmem:[%s0 + $0x1c] sm:$0xf]
    %v33 = vld [vmem:[%s0 + $0x20] sm:$0xf]
    %v34 = vld [vmem:[%s0 + $0x24] sm:$0xf]
    %v35 = vld [vmem:[%s0 + $0x28] sm:$0xf]
    %v36 = vld [vmem:[%s0 + $0x2c] sm:$0xf]
    %v37 = vld [vmem:[%s0 + $0x30] sm:$0xf]
    %v38 = vld [vmem:[%s0 + $0x34] sm:$0xf]
    %v39 = vld [vmem:[%s0 + $0x38] sm:$0xf]
    %v40 = vld [vmem:[%s0 + $0x3c] sm:$0xf]
    %v41 = vld [vmem:[%s1] sm:$0xf]
    %v42 = vld [vmem:[%s1 + $0x4] sm:$0xf]
    %v43 = vld [vmem:[%s3] sm:$0x1]
    %v45 = vperm.slane %v43, 0
    %v63 = vunpack.c.l.b16 %v25
    %v64 = vunpack.c.l.b16 %v26
    %v65 = vunpack.c.l.b16 %v27
    %v66 = vunpack.c.l.b16 %v28
    %v67 = vunpack.c.l.b16 %v29
    %v68 = vunpack.c.l.b16 %v30
    %v69 = vunpack.c.l.b16 %v31
    %v70 = vunpack.c.l.b16 %v32
    %v71 = vunpack.c.l.b16 %v33
    %v72 = vunpack.c.l.b16 %v34
    %v73 = vunpack.c.l.b16 %v35
    %v74 = vunpack.c.l.b16 %v36
    %v75 = vunpack.c.l.b16 %v37
    %v76 = vunpack.c.l.b16 %v38
    %v77 = vunpack.c.l.b16 %v39
    %v78 = vunpack.c.l.b16 %v40
    %v79 = vpack.c.b16 %v64, %v63
    %v80 = vpack.c.b16 %v66, %v65
    %v81 = vpack.c.b16 %v68, %v67
    %v82 = vpack.c.b16 %v70, %v69
    %v83 = vpack.c.b16 %v72, %v71
    %v84 = vpack.c.b16 %v74, %v73
    %v85 = vpack.c.b16 %v76, %v75
    %v86 = vpack.c.b16 %v78, %v77
    %v89 = vunpack.c.l.b16 %v41
    %v90 = vunpack.c.l.b16 %v42
    %v91 = vpack.c.b16 %v90, %v89
    %vm93 = vcmask 130048
    %v95 = vsel %vm93, %v79, 0
    %v98 = vsel %vm93, %v80, 0
    %v101 = vsel %vm93, %v81, 0
    %v104 = vsel %vm93, %v82, 0
    %v107 = vsel %vm93, %v83, 0
    %v110 = vsel %vm93, %v84, 0
    %v113 = vsel %vm93, %v85, 0
    %v116 = vsel %vm93, %v86, 0
    %118 = vmatpush.bf16.msra.mxu0 0
    %119 = vmatpush.bf16.msra.mxu0 0
    %120 = vmatpush.bf16.msra.mxu0 0
    %121 = vmatpush.bf16.msra.mxu0 0
    %122 = vmatpush.bf16.msra.mxu0 0
    %123 = vmatpush.bf16.msra.mxu0 0
    %124 = vmatpush.bf16.msra.mxu0 0
    %125 = vmatpush.bf16.msra.mxu0 %v91
    %126 = vmatmul.bf16.gmra.mxu0 %v95
    %v127 = vpop.f32.mrf.mxu0
    %v128 = vadd.f32 %v45, %v127
    %v129 = vpop.f32.mrf.mxu0
    %v130 = vadd.f32 %v45, %v129
    %131 = vmatmul.bf16.gmra.mxu0 %v98
    %v132 = vpop.f32.mrf.mxu0
    %v133 = vadd.f32 %v45, %v132
    %v134 = vpop.f32.mrf.mxu0
    %v135 = vadd.f32 %v45, %v134
    %136 = vmatmul.bf16.gmra.mxu0 %v101
    %v137 = vpop.f32.mrf.mxu0
    %v138 = vadd.f32 %v45, %v137
    %v139 = vpop.f32.mrf.mxu0
    %v140 = vadd.f32 %v45, %v139
    %141 = vmatmul.bf16.gmra.mxu0 %v104
    %v142 = vpop.f32.mrf.mxu0
    %v143 = vadd.f32 %v45, %v142
    %v144 = vpop.f32.mrf.mxu0
    %v145 = vadd.f32 %v45, %v144
    %146 = vmatmul.bf16.gmra.mxu0 %v107
    %v147 = vpop.f32.mrf.mxu0
    %v148 = vadd.f32 %v45, %v147
    %v149 = vpop.f32.mrf.mxu0
    %v150 = vadd.f32 %v45, %v149
    %151 = vmatmul.bf16.gmra.mxu0 %v110
    %v152 = vpop.f32.mrf.mxu0
    %v153 = vadd.f32 %v45, %v152
    %v154 = vpop.f32.mrf.mxu0
    %v155 = vadd.f32 %v45, %v154
    %156 = vmatmul.bf16.gmra.mxu0 %v113
    %v157 = vpop.f32.mrf.mxu0
    %v158 = vadd.f32 %v45, %v157
    %v159 = vpop.f32.mrf.mxu0
    %v160 = vadd.f32 %v45, %v159
    %161 = vmatmul.bf16.gmra.mxu0 %v116
    %v162 = vpop.f32.mrf.mxu0
    %v163 = vadd.f32 %v45, %v162
    %v164 = vpop.f32.mrf.mxu0
    %v165 = vadd.f32 %v45, %v164
    %166 = vdwg.mxu0
    %167 = vst [vmem:[#allocation2] sm:$0xff] %v128
    %168 = vst [vmem:[#allocation2 + $0x8] sm:$0xff] %v130
    %169 = vst [vmem:[#allocation2 + $0x10] sm:$0xff] %v133
    %170 = vst [vmem:[#allocation2 + $0x18] sm:$0xff] %v135
    %171 = vst [vmem:[#allocation2 + $0x20] sm:$0xff] %v138
    %172 = vst [vmem:[#allocation2 + $0x28] sm:$0xff] %v140
    %173 = vst [vmem:[#allocation2 + $0x30] sm:$0xff] %v143
    %174 = vst [vmem:[#allocation2 + $0x38] sm:$0xff] %v145
    %175 = vst [vmem:[#allocation2 + $0x40] sm:$0xff] %v148
    %176 = vst [vmem:[#allocation2 + $0x48] sm:$0xff] %v150
    %177 = vst [vmem:[#allocation2 + $0x50] sm:$0xff] %v153
    %178 = vst [vmem:[#allocation2 + $0x58] sm:$0xff] %v155
    %179 = vst [vmem:[#allocation2 + $0x60] sm:$0xff] %v158
    %180 = vst [vmem:[#allocation2 + $0x68] sm:$0xff] %v160
    %181 = vst [vmem:[#allocation2 + $0x70] sm:$0xff] %v163
    %182 = vst [vmem:[#allocation2 + $0x78] sm:$0xff] %v165
    %vm183 = vcmask 261120
    %184 = vst.msk [vmem:[#allocation3] sm:$0xff] %vm183, 0.0
    %185 = vst.msk [vmem:[#allocation4] sm:$0xff] %vm183, 0.0
    %186 = vst.msk [vmem:[#allocation5] sm:$0xff] %vm183, 0.0
    %187 = vst.msk [vmem:[#allocation6] sm:$0xff] %vm183, 0.0
    %v188 = vld [vmem:[#allocation2] sm:$0xff]
    %v189 = vld [vmem:[#allocation3] sm:$0xff]
    %v190 = vpack.c.bf16 %v189, %v189
    %v191 = vld [vmem:[%s2] sm:$0xf]
    %v192 = vld [vmem:[%s2 + $0x4] sm:$0xf]
    %v193 = vld [vmem:[%s2 + $0x8] sm:$0xf]
    %v194 = vld [vmem:[%s2 + $0xc] sm:$0xf]
    %v199 = vunpack.c.l.b16 %v191
    %v200 = vunpack.c.l.b16 %v192
    %v201 = vunpack.c.l.b16 %v193
    %v202 = vunpack.c.l.b16 %v194
    %v203 = vpack.c.b16 %v200, %v199
    %v204 = vpack.c.b16 %v202, %v201
    %v208 = vsel %vm183, %v190, 0
    %210 = vmatpush.bf16.msra.mxu0 0
    %211 = vmatpush.bf16.msra.mxu0 0
    %212 = vmatpush.bf16.msra.mxu0 0
    %213 = vmatpush.bf16.msra.mxu0 0
    %214 = vmatpush.bf16.msra.mxu0 0
    %215 = vmatpush.bf16.msra.mxu0 0
    %216 = vmatpush.bf16.msra.mxu0 %v204
    %217 = vmatpush.bf16.msra.mxu0 %v203
    %218 = vmatmul.bf16.gmra.mxu0 %v208
    %v219 = vpop.f32.mrf.mxu0
    %v220 = vadd.f32 0.0, %v219
    %v221 = vpop.f32.mrf.mxu0
    %222 = vdwg.mxu0
    %v223 = vadd.f32 %v188, %v220
    %s224 = scalar_lea.vmem [#allocation2], 8
    %v225 = vld [vmem:[%s224] sm:$0xff]
    %v226 = vld [vmem:[#allocation5] sm:$0xff]
    %v227 = vpack.c.bf16 %v226, %v226
    %v229 = vsel %vm183, %v227, 0
    %231 = vmatpush.bf16.msra.mxu0 0
    %232 = vmatpush.bf16.msra.mxu0 0
    %233 = vmatpush.bf16.msra.mxu0 0
    %234 = vmatpush.bf16.msra.mxu0 0
    %235 = vmatpush.bf16.msra.mxu0 0
    %236 = vmatpush.bf16.msra.mxu0 0
    %237 = vmatpush.bf16.msra.mxu0 %v204
    %238 = vmatpush.bf16.msra.mxu0 %v203
    %239 = vmatmul.bf16.gmra.mxu0 %v229
    %v240 = vpop.f32.mrf.mxu0
    %v241 = vadd.f32 0.0, %v240
    %v242 = vpop.f32.mrf.mxu0
    %243 = vdwg.mxu0
    %v244 = vadd.f32 %v225, %v241
    %v245 = vxor.u32 %v223, 2147483648
    %v246 = vmul.f32 %v245, 1.442695
    %v247 = vpow.pop %v246
    %v248 = vadd.f32 %v247, 1.0
    %v249 = vrcp.pop %v248
    %v250 = vmul.f32 %v248, %v249
    %v251 = vsub.f32 1.0, %v250
    %v252 = vmul.f32 %v249, %v251
    %v253 = vadd.f32 %v249, %v252
    %vm254 = vweird.f32 %v248
    %vm255 = vweird.f32 %v249
    %vm256 = vmor %vm254, %vm255
    %v257 = vsel %vm256, %v249, %v253
    %v258 = vand.u32 2147483647, %v248
    %vm259 = vcmp.eq.f32.partialorder %v258, 8.507059e+37
    %v260 = vand.u32 %v248, 2147483648
    %v261 = vor.u32 1.1754944e-38, %v260
    %v262 = vsel %vm259, %v261, %v257
    %v263 = vmul.f32 1.0, %v262
    %v264 = vtanh.pop %v223
    %v265 = vld [vmem:[#allocation4] sm:$0xff]
    %267 = vrot.lane.b32.xlu0 %v265, 32
    %v268 = vpop.permute.xlu0 %267
    %v270 = vmul.f32 %v263, %v268
    %272 = vrot.lane.b32.xlu0 %v264, 32
    %v273 = vpop.permute.xlu0 %272
    %v275 = vmul.f32 %v263, %v273
    %277 = vrot.lane.b32.xlu0 %v275, 32
    %v278 = vpop.permute.xlu0 %277
    %v280 = vadd.f32 %v270, %v278
    %282 = vrot.lane.b32.xlu0 %v280, 96
    %v283 = vpop.permute.xlu0 %282
    %285 = vst.msk [vmem:[#allocation4] sm:$0xff] %vm183, %v283
    %v286 = vtanh.pop %v280
    %288 = vrot.lane.b32.xlu0 %v286, 32
    %v289 = vpop.permute.xlu0 %288
    %v291 = vmul.f32 %v263, %v289
    %293 = vrot.lane.b32.xlu0 %v291, 64
    %v294 = vpop.permute.xlu0 %293
    %296 = vst.msk [vmem:[#allocation3] sm:$0xff] %vm183, %v294
    %v297 = vxor.u32 %v244, 2147483648
    %v298 = vmul.f32 %v297, 1.442695
    %v299 = vpow.pop %v298
    %v300 = vadd.f32 %v299, 1.0
    %v301 = vrcp.pop %v300
    %v302 = vmul.f32 %v300, %v301
    %v303 = vsub.f32 1.0, %v302
    %v304 = vmul.f32 %v301, %v303
    %v305 = vadd.f32 %v301, %v304
    %vm306 = vweird.f32 %v300
    %vm307 = vweird.f32 %v301
    %vm308 = vmor %vm306, %vm307
    %v309 = vsel %vm308, %v301, %v305
    %v310 = vand.u32 2147483647, %v300
    %vm311 = vcmp.eq.f32.partialorder %v310, 8.507059e+37
    %v312 = vand.u32 %v300, 2147483648
    %v313 = vor.u32 1.1754944e-38, %v312
    %v314 = vsel %vm311, %v313, %v309
    %v315 = vmul.f32 1.0, %v314
    %v316 = vtanh.pop %v244
    %v317 = vld [vmem:[#allocation6] sm:$0xff]
    %319 = vrot.lane.b32.xlu0 %v317, 32
    %v320 = vpop.permute.xlu0 %319
    %v322 = vmul.f32 %v315, %v320
    %324 = vrot.lane.b32.xlu0 %v316, 32
    %v325 = vpop.permute.xlu0 %324
    %v327 = vmul.f32 %v315, %v325
    %329 = vrot.lane.b32.xlu0 %v327, 32
    %v330 = vpop.permute.xlu0 %329
    %v332 = vadd.f32 %v322, %v330
    %334 = vrot.lane.b32.xlu0 %v332, 96
    %v335 = vpop.permute.xlu0 %334
    %337 = vst.msk [vmem:[#allocation6] sm:$0xff] %vm183, %v335
    %v338 = vtanh.pop %v332
    %340 = vrot.lane.b32.xlu0 %v338, 32
    %v341 = vpop.permute.xlu0 %340
    %v343 = vmul.f32 %v315, %v341
    %345 = vrot.lane.b32.xlu0 %v343, 64
    %v346 = vpop.permute.xlu0 %345
    %348 = vst.msk [vmem:[#allocation5] sm:$0xff] %vm183, %v346
    %s349 = scalar_lea.vmem [#allocation2], 16
    %v350 = vld [vmem:[%s349] sm:$0xff]
    %v351 = vld [vmem:[#allocation3] sm:$0xff]
    %v352 = vpack.c.bf16 %v351, %v351
    %v353 = vld [vmem:[%s2] sm:$0xf]
    %v354 = vld [vmem:[%s2 + $0x4] sm:$0xf]
    %v355 = vld [vmem:[%s2 + $0x8] sm:$0xf]
    %v356 = vld [vmem:[%s2 + $0xc] sm:$0xf]
    %v361 = vunpack.c.l.b16 %v353
    %v362 = vunpack.c.l.b16 %v354
    %v363 = vunpack.c.l.b16 %v355
    %v364 = vunpack.c.l.b16 %v356
    %v365 = vpack.c.b16 %v362, %v361
    %v366 = vpack.c.b16 %v364, %v363
    %v370 = vsel %vm183, %v352, 0
    %372 = vmatpush.bf16.msra.mxu0 0
    %373 = vmatpush.bf16.msra.mxu0 0
    %374 = vmatpush.bf16.msra.mxu0 0
    %375 = vmatpush.bf16.msra.mxu0 0
    %376 = vmatpush.bf16.msra.mxu0 0
    %377 = vmatpush.bf16.msra.mxu0 0
    %378 = vmatpush.bf16.msra.mxu0 %v366
    %379 = vmatpush.bf16.msra.mxu0 %v365
    %380 = vmatmul.bf16.gmra.mxu0 %v370
    %v381 = vpop.f32.mrf.mxu0
    %v382 = vadd.f32 0.0, %v381
    %v383 = vpop.f32.mrf.mxu0
    %384 = vdwg.mxu0
    %v385 = vadd.f32 %v350, %v382
    %s386 = scalar_lea.vmem [#allocation2], 24
    %v387 = vld [vmem:[%s386] sm:$0xff]
    %v388 = vld [vmem:[#allocation5] sm:$0xff]
    %v389 = vpack.c.bf16 %v388, %v388
    %v391 = vsel %vm183, %v389, 0
    %393 = vmatpush.bf16.msra.mxu0 0
    %394 = vmatpush.bf16.msra.mxu0 0
    %395 = vmatpush.bf16.msra.mxu0 0
    %396 = vmatpush.bf16.msra.mxu0 0
    %397 = vmatpush.bf16.msra.mxu0 0
    %398 = vmatpush.bf16.msra.mxu0 0
    %399 = vmatpush.bf16.msra.mxu0 %v366
    %400 = vmatpush.bf16.msra.mxu0 %v365
    %401 = vmatmul.bf16.gmra.mxu0 %v391
    %v402 = vpop.f32.mrf.mxu0
    %v403 = vadd.f32 0.0, %v402
    %v404 = vpop.f32.mrf.mxu0
    %405 = vdwg.mxu0
    %v406 = vadd.f32 %v387, %v403
    %v407 = vxor.u32 %v385, 2147483648
    %v408 = vmul.f32 %v407, 1.442695
    %v409 = vpow.pop %v408
    %v410 = vadd.f32 %v409, 1.0
    %v411 = vrcp.pop %v410
    %v412 = vmul.f32 %v410, %v411
    %v413 = vsub.f32 1.0, %v412
    %v414 = vmul.f32 %v411, %v413
    %v415 = vadd.f32 %v411, %v414
    %vm416 = vweird.f32 %v410
    %vm417 = vweird.f32 %v411
    %vm418 = vmor %vm416, %vm417
    %v419 = vsel %vm418, %v411, %v415
    %v420 = vand.u32 2147483647, %v410
    %vm421 = vcmp.eq.f32.partialorder %v420, 8.507059e+37
    %v422 = vand.u32 %v410, 2147483648
    %v423 = vor.u32 1.1754944e-38, %v422
    %v424 = vsel %vm421, %v423, %v419
    %v425 = vmul.f32 1.0, %v424
    %v426 = vtanh.pop %v385
    %v427 = vld [vmem:[#allocation4] sm:$0xff]
    %429 = vrot.lane.b32.xlu0 %v427, 32
    %v430 = vpop.permute.xlu0 %429
    %v432 = vmul.f32 %v425, %v430
    %434 = vrot.lane.b32.xlu0 %v426, 32
    %v435 = vpop.permute.xlu0 %434
    %v437 = vmul.f32 %v425, %v435
    %439 = vrot.lane.b32.xlu0 %v437, 32
    %v440 = vpop.permute.xlu0 %439
    %v442 = vadd.f32 %v432, %v440
    %444 = vrot.lane.b32.xlu0 %v442, 96
    %v445 = vpop.permute.xlu0 %444
    %447 = vst.msk [vmem:[#allocation4] sm:$0xff] %vm183, %v445
    %v448 = vtanh.pop %v442
    %450 = vrot.lane.b32.xlu0 %v448, 32
    %v451 = vpop.permute.xlu0 %450
    %v453 = vmul.f32 %v425, %v451
    %455 = vrot.lane.b32.xlu0 %v453, 64
    %v456 = vpop.permute.xlu0 %455
    %458 = vst.msk [vmem:[#allocation3] sm:$0xff] %vm183, %v456
    %v459 = vxor.u32 %v406, 2147483648
    %v460 = vmul.f32 %v459, 1.442695
    %v461 = vpow.pop %v460
    %v462 = vadd.f32 %v461, 1.0
    %v463 = vrcp.pop %v462
    %v464 = vmul.f32 %v462, %v463
    %v465 = vsub.f32 1.0, %v464
    %v466 = vmul.f32 %v463, %v465
    %v467 = vadd.f32 %v463, %v466
    %vm468 = vweird.f32 %v462
    %vm469 = vweird.f32 %v463
    %vm470 = vmor %vm468, %vm469
    %v471 = vsel %vm470, %v463, %v467
    %v472 = vand.u32 2147483647, %v462
    %vm473 = vcmp.eq.f32.partialorder %v472, 8.507059e+37
    %v474 = vand.u32 %v462, 2147483648
    %v475 = vor.u32 1.1754944e-38, %v474
    %v476 = vsel %vm473, %v475, %v471
    %v477 = vmul.f32 1.0, %v476
    %v478 = vtanh.pop %v406
    %v479 = vld [vmem:[#allocation6] sm:$0xff]
    %481 = vrot.lane.b32.xlu0 %v479, 32
    %v482 = vpop.permute.xlu0 %481
    %v484 = vmul.f32 %v477, %v482
    %486 = vrot.lane.b32.xlu0 %v478, 32
    %v487 = vpop.permute.xlu0 %486
    %v489 = vmul.f32 %v477, %v487
    %491 = vrot.lane.b32.xlu0 %v489, 32
    %v492 = vpop.permute.xlu0 %491
    %v494 = vadd.f32 %v484, %v492
    %496 = vrot.lane.b32.xlu0 %v494, 96
    %v497 = vpop.permute.xlu0 %496
    %499 = vst.msk [vmem:[#allocation6] sm:$0xff] %vm183, %v497
    %v500 = vtanh.pop %v494
    %502 = vrot.lane.b32.xlu0 %v500, 32
    %v503 = vpop.permute.xlu0 %502
    %v505 = vmul.f32 %v477, %v503
    %507 = vrot.lane.b32.xlu0 %v505, 64
    %v508 = vpop.permute.xlu0 %507
    %510 = vst.msk [vmem:[#allocation5] sm:$0xff] %vm183, %v508
    %s511 = scalar_lea.vmem [#allocation2], 32
    %v512 = vld [vmem:[%s511] sm:$0xff]
    %v513 = vld [vmem:[#allocation3] sm:$0xff]
    %v514 = vpack.c.bf16 %v513, %v513
    %v515 = vld [vmem:[%s2] sm:$0xf]
    %v516 = vld [vmem:[%s2 + $0x4] sm:$0xf]
    %v517 = vld [vmem:[%s2 + $0x8] sm:$0xf]
    %v518 = vld [vmem:[%s2 + $0xc] sm:$0xf]
    %v523 = vunpack.c.l.b16 %v515
    %v524 = vunpack.c.l.b16 %v516
    %v525 = vunpack.c.l.b16 %v517
    %v526 = vunpack.c.l.b16 %v518
    %v527 = vpack.c.b16 %v524, %v523
    %v528 = vpack.c.b16 %v526, %v525
    %v532 = vsel %vm183, %v514, 0
    %534 = vmatpush.bf16.msra.mxu0 0
    %535 = vmatpush.bf16.msra.mxu0 0
    %536 = vmatpush.bf16.msra.mxu0 0
    %537 = vmatpush.bf16.msra.mxu0 0
    %538 = vmatpush.bf16.msra.mxu0 0
    %539 = vmatpush.bf16.msra.mxu0 0
    %540 = vmatpush.bf16.msra.mxu0 %v528
    %541 = vmatpush.bf16.msra.mxu0 %v527
    %542 = vmatmul.bf16.gmra.mxu0 %v532
    %v543 = vpop.f32.mrf.mxu0
    %v544 = vadd.f32 0.0, %v543
    %v545 = vpop.f32.mrf.mxu0
    %546 = vdwg.mxu0
    %v547 = vadd.f32 %v512, %v544
    %s548 = scalar_lea.vmem [#allocation2], 40
    %v549 = vld [vmem:[%s548] sm:$0xff]
    %v550 = vld [vmem:[#allocation5] sm:$0xff]
    %v551 = vpack.c.bf16 %v550, %v550
    %v553 = vsel %vm183, %v551, 0
    %555 = vmatpush.bf16.msra.mxu0 0
    %556 = vmatpush.bf16.msra.mxu0 0
    %557 = vmatpush.bf16.msra.mxu0 0
    %558 = vmatpush.bf16.msra.mxu0 0
    %559 = vmatpush.bf16.msra.mxu0 0
    %560 = vmatpush.bf16.msra.mxu0 0
    %561 = vmatpush.bf16.msra.mxu0 %v528
    %562 = vmatpush.bf16.msra.mxu0 %v527
    %563 = vmatmul.bf16.gmra.mxu0 %v553
    %v564 = vpop.f32.mrf.mxu0
    %v565 = vadd.f32 0.0, %v564
    %v566 = vpop.f32.mrf.mxu0
    %567 = vdwg.mxu0
    %v568 = vadd.f32 %v549, %v565
    %v569 = vxor.u32 %v547, 2147483648
    %v570 = vmul.f32 %v569, 1.442695
    %v571 = vpow.pop %v570
    %v572 = vadd.f32 %v571, 1.0
    %v573 = vrcp.pop %v572
    %v574 = vmul.f32 %v572, %v573
    %v575 = vsub.f32 1.0, %v574
    %v576 = vmul.f32 %v573, %v575
    %v577 = vadd.f32 %v573, %v576
    %vm578 = vweird.f32 %v572
    %vm579 = vweird.f32 %v573
    %vm580 = vmor %vm578, %vm579
    %v581 = vsel %vm580, %v573, %v577
    %v582 = vand.u32 2147483647, %v572
    %vm583 = vcmp.eq.f32.partialorder %v582, 8.507059e+37
    %v584 = vand.u32 %v572, 2147483648
    %v585 = vor.u32 1.1754944e-38, %v584
    %v586 = vsel %vm583, %v585, %v581
    %v587 = vmul.f32 1.0, %v586
    %v588 = vtanh.pop %v547
    %v589 = vld [vmem:[#allocation4] sm:$0xff]
    %591 = vrot.lane.b32.xlu0 %v589, 32
    %v592 = vpop.permute.xlu0 %591
    %v594 = vmul.f32 %v587, %v592
    %596 = vrot.lane.b32.xlu0 %v588, 32
    %v597 = vpop.permute.xlu0 %596
    %v599 = vmul.f32 %v587, %v597
    %601 = vrot.lane.b32.xlu0 %v599, 32
    %v602 = vpop.permute.xlu0 %601
    %v604 = vadd.f32 %v594, %v602
    %606 = vrot.lane.b32.xlu0 %v604, 96
    %v607 = vpop.permute.xlu0 %606
    %609 = vst.msk [vmem:[#allocation4] sm:$0xff] %vm183, %v607
    %v610 = vtanh.pop %v604
    %612 = vrot.lane.b32.xlu0 %v610, 32
    %v613 = vpop.permute.xlu0 %612
    %v615 = vmul.f32 %v587, %v613
    %617 = vrot.lane.b32.xlu0 %v615, 64
    %v618 = vpop.permute.xlu0 %617
    %620 = vst.msk [vmem:[#allocation3] sm:$0xff] %vm183, %v618
    %v621 = vxor.u32 %v568, 2147483648
    %v622 = vmul.f32 %v621, 1.442695
    %v623 = vpow.pop %v622
    %v624 = vadd.f32 %v623, 1.0
    %v625 = vrcp.pop %v624
    %v626 = vmul.f32 %v624, %v625
    %v627 = vsub.f32 1.0, %v626
    %v628 = vmul.f32 %v625, %v627
    %v629 = vadd.f32 %v625, %v628
    %vm630 = vweird.f32 %v624
    %vm631 = vweird.f32 %v625
    %vm632 = vmor %vm630, %vm631
    %v633 = vsel %vm632, %v625, %v629
    %v634 = vand.u32 2147483647, %v624
    %vm635 = vcmp.eq.f32.partialorder %v634, 8.507059e+37
    %v636 = vand.u32 %v624, 2147483648
    %v637 = vor.u32 1.1754944e-38, %v636
    %v638 = vsel %vm635, %v637, %v633
    %v639 = vmul.f32 1.0, %v638
    %v640 = vtanh.pop %v568
    %v641 = vld [vmem:[#allocation6] sm:$0xff]
    %643 = vrot.lane.b32.xlu0 %v641, 32
    %v644 = vpop.permute.xlu0 %643
    %v646 = vmul.f32 %v639, %v644
    %648 = vrot.lane.b32.xlu0 %v640, 32
    %v649 = vpop.permute.xlu0 %648
    %v651 = vmul.f32 %v639, %v649
    %653 = vrot.lane.b32.xlu0 %v651, 32
    %v654 = vpop.permute.xlu0 %653
    %v656 = vadd.f32 %v646, %v654
    %658 = vrot.lane.b32.xlu0 %v656, 96
    %v659 = vpop.permute.xlu0 %658
    %661 = vst.msk [vmem:[#allocation6] sm:$0xff] %vm183, %v659
    %v662 = vtanh.pop %v656
    %664 = vrot.lane.b32.xlu0 %v662, 32
    %v665 = vpop.permute.xlu0 %664
    %v667 = vmul.f32 %v639, %v665
    %669 = vrot.lane.b32.xlu0 %v667, 64
    %v670 = vpop.permute.xlu0 %669
    %672 = vst.msk [vmem:[#allocation5] sm:$0xff] %vm183, %v670
    %s673 = scalar_lea.vmem [#allocation2], 48
    %v674 = vld [vmem:[%s673] sm:$0xff]
    %v675 = vld [vmem:[#allocation3] sm:$0xff]
    %v676 = vpack.c.bf16 %v675, %v675
    %v677 = vld [vmem:[%s2] sm:$0xf]
    %v678 = vld [vmem:[%s2 + $0x4] sm:$0xf]
    %v679 = vld [vmem:[%s2 + $0x8] sm:$0xf]
    %v680 = vld [vmem:[%s2 + $0xc] sm:$0xf]
    %v685 = vunpack.c.l.b16 %v677
    %v686 = vunpack.c.l.b16 %v678
    %v687 = vunpack.c.l.b16 %v679
    %v688 = vunpack.c.l.b16 %v680
    %v689 = vpack.c.b16 %v686, %v685
    %v690 = vpack.c.b16 %v688, %v687
    %v694 = vsel %vm183, %v676, 0
    %696 = vmatpush.bf16.msra.mxu0 0
    %697 = vmatpush.bf16.msra.mxu0 0
    %698 = vmatpush.bf16.msra.mxu0 0
    %699 = vmatpush.bf16.msra.mxu0 0
    %700 = vmatpush.bf16.msra.mxu0 0
    %701 = vmatpush.bf16.msra.mxu0 0
    %702 = vmatpush.bf16.msra.mxu0 %v690
    %703 = vmatpush.bf16.msra.mxu0 %v689
    %704 = vmatmul.bf16.gmra.mxu0 %v694
    %v705 = vpop.f32.mrf.mxu0
    %v706 = vadd.f32 0.0, %v705
    %v707 = vpop.f32.mrf.mxu0
    %708 = vdwg.mxu0
    %v709 = vadd.f32 %v674, %v706
    %s710 = scalar_lea.vmem [#allocation2], 56
    %v711 = vld [vmem:[%s710] sm:$0xff]
    %v712 = vld [vmem:[#allocation5] sm:$0xff]
    %v713 = vpack.c.bf16 %v712, %v712
    %v715 = vsel %vm183, %v713, 0
    %717 = vmatpush.bf16.msra.mxu0 0
    %718 = vmatpush.bf16.msra.mxu0 0
    %719 = vmatpush.bf16.msra.mxu0 0
    %720 = vmatpush.bf16.msra.mxu0 0
    %721 = vmatpush.bf16.msra.mxu0 0
    %722 = vmatpush.bf16.msra.mxu0 0
    %723 = vmatpush.bf16.msra.mxu0 %v690
    %724 = vmatpush.bf16.msra.mxu0 %v689
    %725 = vmatmul.bf16.gmra.mxu0 %v715
    %v726 = vpop.f32.mrf.mxu0
    %v727 = vadd.f32 0.0, %v726
    %v728 = vpop.f32.mrf.mxu0
    %729 = vdwg.mxu0
    %v730 = vadd.f32 %v711, %v727
    %v731 = vxor.u32 %v709, 2147483648
    %v732 = vmul.f32 %v731, 1.442695
    %v733 = vpow.pop %v732
    %v734 = vadd.f32 %v733, 1.0
    %v735 = vrcp.pop %v734
    %v736 = vmul.f32 %v734, %v735
    %v737 = vsub.f32 1.0, %v736
    %v738 = vmul.f32 %v735, %v737
    %v739 = vadd.f32 %v735, %v738
    %vm740 = vweird.f32 %v734
    %vm741 = vweird.f32 %v735
    %vm742 = vmor %vm740, %vm741
    %v743 = vsel %vm742, %v735, %v739
    %v744 = vand.u32 2147483647, %v734
    %vm745 = vcmp.eq.f32.partialorder %v744, 8.507059e+37
    %v746 = vand.u32 %v734, 2147483648
    %v747 = vor.u32 1.1754944e-38, %v746
    %v748 = vsel %vm745, %v747, %v743
    %v749 = vmul.f32 1.0, %v748
    %v750 = vtanh.pop %v709
    %v751 = vld [vmem:[#allocation4] sm:$0xff]
    %753 = vrot.lane.b32.xlu0 %v751, 32
    %v754 = vpop.permute.xlu0 %753
    %v756 = vmul.f32 %v749, %v754
    %758 = vrot.lane.b32.xlu0 %v750, 32
    %v759 = vpop.permute.xlu0 %758
    %v761 = vmul.f32 %v749, %v759
    %763 = vrot.lane.b32.xlu0 %v761, 32
    %v764 = vpop.permute.xlu0 %763
    %v766 = vadd.f32 %v756, %v764
    %768 = vrot.lane.b32.xlu0 %v766, 96
    %v769 = vpop.permute.xlu0 %768
    %771 = vst.msk [vmem:[#allocation4] sm:$0xff] %vm183, %v769
    %v772 = vtanh.pop %v766
    %774 = vrot.lane.b32.xlu0 %v772, 32
    %v775 = vpop.permute.xlu0 %774
    %v777 = vmul.f32 %v749, %v775
    %779 = vrot.lane.b32.xlu0 %v777, 64
    %v780 = vpop.permute.xlu0 %779
    %782 = vst.msk [vmem:[#allocation3] sm:$0xff] %vm183, %v780
    %v783 = vxor.u32 %v730, 2147483648
    %v784 = vmul.f32 %v783, 1.442695
    %v785 = vpow.pop %v784
    %v786 = vadd.f32 %v785, 1.0
    %v787 = vrcp.pop %v786
    %v788 = vmul.f32 %v786, %v787
    %v789 = vsub.f32 1.0, %v788
    %v790 = vmul.f32 %v787, %v789
    %v791 = vadd.f32 %v787, %v790
    %vm792 = vweird.f32 %v786
    %vm793 = vweird.f32 %v787
    %vm794 = vmor %vm792, %vm793
    %v795 = vsel %vm794, %v787, %v791
    %v796 = vand.u32 2147483647, %v786
    %vm797 = vcmp.eq.f32.partialorder %v796, 8.507059e+37
    %v798 = vand.u32 %v786, 2147483648
    %v799 = vor.u32 1.1754944e-38, %v798
    %v800 = vsel %vm797, %v799, %v795
    %v801 = vmul.f32 1.0, %v800
    %v802 = vtanh.pop %v730
    %v803 = vld [vmem:[#allocation6] sm:$0xff]
    %805 = vrot.lane.b32.xlu0 %v803, 32
    %v806 = vpop.permute.xlu0 %805
    %v808 = vmul.f32 %v801, %v806
    %810 = vrot.lane.b32.xlu0 %v802, 32
    %v811 = vpop.permute.xlu0 %810
    %v813 = vmul.f32 %v801, %v811
    %815 = vrot.lane.b32.xlu0 %v813, 32
    %v816 = vpop.permute.xlu0 %815
    %v818 = vadd.f32 %v808, %v816
    %820 = vrot.lane.b32.xlu0 %v818, 96
    %v821 = vpop.permute.xlu0 %820
    %823 = vst.msk [vmem:[#allocation6] sm:$0xff] %vm183, %v821
    %v824 = vtanh.pop %v818
    %826 = vrot.lane.b32.xlu0 %v824, 32
    %v827 = vpop.permute.xlu0 %826
    %v829 = vmul.f32 %v801, %v827
    %831 = vrot.lane.b32.xlu0 %v829, 64
    %v832 = vpop.permute.xlu0 %831
    %834 = vst.msk [vmem:[#allocation5] sm:$0xff] %vm183, %v832
    %s835 = scalar_lea.vmem [#allocation2], 64
    %v836 = vld [vmem:[%s835] sm:$0xff]
    %v837 = vld [vmem:[#allocation3] sm:$0xff]
    %v838 = vpack.c.bf16 %v837, %v837
    %v839 = vld [vmem:[%s2] sm:$0xf]
    %v840 = vld [vmem:[%s2 + $0x4] sm:$0xf]
    %v841 = vld [vmem:[%s2 + $0x8] sm:$0xf]
    %v842 = vld [vmem:[%s2 + $0xc] sm:$0xf]
    %v847 = vunpack.c.l.b16 %v839
    %v848 = vunpack.c.l.b16 %v840
    %v849 = vunpack.c.l.b16 %v841
    %v850 = vunpack.c.l.b16 %v842
    %v851 = vpack.c.b16 %v848, %v847
    %v852 = vpack.c.b16 %v850, %v849
    %v856 = vsel %vm183, %v838, 0
    %858 = vmatpush.bf16.msra.mxu0 0
    %859 = vmatpush.bf16.msra.mxu0 0
    %860 = vmatpush.bf16.msra.mxu0 0
    %861 = vmatpush.bf16.msra.mxu0 0
    %862 = vmatpush.bf16.msra.mxu0 0
    %863 = vmatpush.bf16.msra.mxu0 0
    %864 = vmatpush.bf16.msra.mxu0 %v852
    %865 = vmatpush.bf16.msra.mxu0 %v851
    %866 = vmatmul.bf16.gmra.mxu0 %v856
    %v867 = vpop.f32.mrf.mxu0
    %v868 = vadd.f32 0.0, %v867
    %v869 = vpop.f32.mrf.mxu0
    %870 = vdwg.mxu0
    %v871 = vadd.f32 %v836, %v868
    %s872 = scalar_lea.vmem [#allocation2], 72
    %v873 = vld [vmem:[%s872] sm:$0xff]
    %v874 = vld [vmem:[#allocation5] sm:$0xff]
    %v875 = vpack.c.bf16 %v874, %v874
    %v877 = vsel %vm183, %v875, 0
    %879 = vmatpush.bf16.msra.mxu0 0
    %880 = vmatpush.bf16.msra.mxu0 0
    %881 = vmatpush.bf16.msra.mxu0 0
    %882 = vmatpush.bf16.msra.mxu0 0
    %883 = vmatpush.bf16.msra.mxu0 0
    %884 = vmatpush.bf16.msra.mxu0 0
    %885 = vmatpush.bf16.msra.mxu0 %v852
    %886 = vmatpush.bf16.msra.mxu0 %v851
    %887 = vmatmul.bf16.gmra.mxu0 %v877
    %v888 = vpop.f32.mrf.mxu0
    %v889 = vadd.f32 0.0, %v888
    %v890 = vpop.f32.mrf.mxu0
    %891 = vdwg.mxu0
    %v892 = vadd.f32 %v873, %v889
    %v893 = vxor.u32 %v871, 2147483648
    %v894 = vmul.f32 %v893, 1.442695
    %v895 = vpow.pop %v894
    %v896 = vadd.f32 %v895, 1.0
    %v897 = vrcp.pop %v896
    %v898 = vmul.f32 %v896, %v897
    %v899 = vsub.f32 1.0, %v898
    %v900 = vmul.f32 %v897, %v899
    %v901 = vadd.f32 %v897, %v900
    %vm902 = vweird.f32 %v896
    %vm903 = vweird.f32 %v897
    %vm904 = vmor %vm902, %vm903
    %v905 = vsel %vm904, %v897, %v901
    %v906 = vand.u32 2147483647, %v896
    %vm907 = vcmp.eq.f32.partialorder %v906, 8.507059e+37
    %v908 = vand.u32 %v896, 2147483648
    %v909 = vor.u32 1.1754944e-38, %v908
    %v910 = vsel %vm907, %v909, %v905
    %v911 = vmul.f32 1.0, %v910
    %v912 = vtanh.pop %v871
    %v913 = vld [vmem:[#allocation4] sm:$0xff]
    %915 = vrot.lane.b32.xlu0 %v913, 32
    %v916 = vpop.permute.xlu0 %915
    %v918 = vmul.f32 %v911, %v916
    %920 = vrot.lane.b32.xlu0 %v912, 32
    %v921 = vpop.permute.xlu0 %920
    %v923 = vmul.f32 %v911, %v921
    %925 = vrot.lane.b32.xlu0 %v923, 32
    %v926 = vpop.permute.xlu0 %925
    %v928 = vadd.f32 %v918, %v926
    %930 = vrot.lane.b32.xlu0 %v928, 96
    %v931 = vpop.permute.xlu0 %930
    %933 = vst.msk [vmem:[#allocation4] sm:$0xff] %vm183, %v931
    %v934 = vtanh.pop %v928
    %936 = vrot.lane.b32.xlu0 %v934, 32
    %v937 = vpop.permute.xlu0 %936
    %v939 = vmul.f32 %v911, %v937
    %941 = vrot.lane.b32.xlu0 %v939, 64
    %v942 = vpop.permute.xlu0 %941
    %944 = vst.msk [vmem:[#allocation3] sm:$0xff] %vm183, %v942
    %v945 = vxor.u32 %v892, 2147483648
    %v946 = vmul.f32 %v945, 1.442695
    %v947 = vpow.pop %v946
    %v948 = vadd.f32 %v947, 1.0
    %v949 = vrcp.pop %v948
    %v950 = vmul.f32 %v948, %v949
    %v951 = vsub.f32 1.0, %v950
    %v952 = vmul.f32 %v949, %v951
    %v953 = vadd.f32 %v949, %v952
    %vm954 = vweird.f32 %v948
    %vm955 = vweird.f32 %v949
    %vm956 = vmor %vm954, %vm955
    %v957 = vsel %vm956, %v949, %v953
    %v958 = vand.u32 2147483647, %v948
    %vm959 = vcmp.eq.f32.partialorder %v958, 8.507059e+37
    %v960 = vand.u32 %v948, 2147483648
    %v961 = vor.u32 1.1754944e-38, %v960
    %v962 = vsel %vm959, %v961, %v957
    %v963 = vmul.f32 1.0, %v962
    %v964 = vtanh.pop %v892
    %v965 = vld [vmem:[#allocation6] sm:$0xff]
    %967 = vrot.lane.b32.xlu0 %v965, 32
    %v968 = vpop.permute.xlu0 %967
    %v970 = vmul.f32 %v963, %v968
    %972 = vrot.lane.b32.xlu0 %v964, 32
    %v973 = vpop.permute.xlu0 %972
    %v975 = vmul.f32 %v963, %v973
    %977 = vrot.lane.b32.xlu0 %v975, 32
    %v978 = vpop.permute.xlu0 %977
    %v980 = vadd.f32 %v970, %v978
    %982 = vrot.lane.b32.xlu0 %v980, 96
    %v983 = vpop.permute.xlu0 %982
    %985 = vst.msk [vmem:[#allocation6] sm:$0xff] %vm183, %v983
    %v986 = vtanh.pop %v980
    %988 = vrot.lane.b32.xlu0 %v986, 32
    %v989 = vpop.permute.xlu0 %988
    %v991 = vmul.f32 %v963, %v989
    %993 = vrot.lane.b32.xlu0 %v991, 64
    %v994 = vpop.permute.xlu0 %993
    %996 = vst.msk [vmem:[#allocation5] sm:$0xff] %vm183, %v994
    %s997 = scalar_lea.vmem [#allocation2], 80
    %v998 = vld [vmem:[%s997] sm:$0xff]
    %v999 = vld [vmem:[#allocation3] sm:$0xff]
    %v1000 = vpack.c.bf16 %v999, %v999
    %v1001 = vld [vmem:[%s2] sm:$0xf]
    %v1002 = vld [vmem:[%s2 + $0x4] sm:$0xf]
    %v1003 = vld [vmem:[%s2 + $0x8] sm:$0xf]
    %v1004 = vld [vmem:[%s2 + $0xc] sm:$0xf]
    %v1009 = vunpack.c.l.b16 %v1001
    %v1010 = vunpack.c.l.b16 %v1002
    %v1011 = vunpack.c.l.b16 %v1003
    %v1012 = vunpack.c.l.b16 %v1004
    %v1013 = vpack.c.b16 %v1010, %v1009
    %v1014 = vpack.c.b16 %v1012, %v1011
    %v1018 = vsel %vm183, %v1000, 0
    %1020 = vmatpush.bf16.msra.mxu0 0
    %1021 = vmatpush.bf16.msra.mxu0 0
    %1022 = vmatpush.bf16.msra.mxu0 0
    %1023 = vmatpush.bf16.msra.mxu0 0
    %1024 = vmatpush.bf16.msra.mxu0 0
    %1025 = vmatpush.bf16.msra.mxu0 0
    %1026 = vmatpush.bf16.msra.mxu0 %v1014
    %1027 = vmatpush.bf16.msra.mxu0 %v1013
    %1028 = vmatmul.bf16.gmra.mxu0 %v1018
    %v1029 = vpop.f32.mrf.mxu0
    %v1030 = vadd.f32 0.0, %v1029
    %v1031 = vpop.f32.mrf.mxu0
    %1032 = vdwg.mxu0
    %v1033 = vadd.f32 %v998, %v1030
    %s1034 = scalar_lea.vmem [#allocation2], 88
    %v1035 = vld [vmem:[%s1034] sm:$0xff]
    %v1036 = vld [vmem:[#allocation5] sm:$0xff]
    %v1037 = vpack.c.bf16 %v1036, %v1036
    %v1039 = vsel %vm183, %v1037, 0
    %1041 = vmatpush.bf16.msra.mxu0 0
    %1042 = vmatpush.bf16.msra.mxu0 0
    %1043 = vmatpush.bf16.msra.mxu0 0
    %1044 = vmatpush.bf16.msra.mxu0 0
    %1045 = vmatpush.bf16.msra.mxu0 0
    %1046 = vmatpush.bf16.msra.mxu0 0
    %1047 = vmatpush.bf16.msra.mxu0 %v1014
    %1048 = vmatpush.bf16.msra.mxu0 %v1013
    %1049 = vmatmul.bf16.gmra.mxu0 %v1039
    %v1050 = vpop.f32.mrf.mxu0
    %v1051 = vadd.f32 0.0, %v1050
    %v1052 = vpop.f32.mrf.mxu0
    %1053 = vdwg.mxu0
    %v1054 = vadd.f32 %v1035, %v1051
    %v1055 = vxor.u32 %v1033, 2147483648
    %v1056 = vmul.f32 %v1055, 1.442695
    %v1057 = vpow.pop %v1056
    %v1058 = vadd.f32 %v1057, 1.0
    %v1059 = vrcp.pop %v1058
    %v1060 = vmul.f32 %v1058, %v1059
    %v1061 = vsub.f32 1.0, %v1060
    %v1062 = vmul.f32 %v1059, %v1061
    %v1063 = vadd.f32 %v1059, %v1062
    %vm1064 = vweird.f32 %v1058
    %vm1065 = vweird.f32 %v1059
    %vm1066 = vmor %vm1064, %vm1065
    %v1067 = vsel %vm1066, %v1059, %v1063
    %v1068 = vand.u32 2147483647, %v1058
    %vm1069 = vcmp.eq.f32.partialorder %v1068, 8.507059e+37
    %v1070 = vand.u32 %v1058, 2147483648
    %v1071 = vor.u32 1.1754944e-38, %v1070
    %v1072 = vsel %vm1069, %v1071, %v1067
    %v1073 = vmul.f32 1.0, %v1072
    %v1074 = vtanh.pop %v1033
    %v1075 = vld [vmem:[#allocation4] sm:$0xff]
    %1077 = vrot.lane.b32.xlu0 %v1075, 32
    %v1078 = vpop.permute.xlu0 %1077
    %v1080 = vmul.f32 %v1073, %v1078
    %1082 = vrot.lane.b32.xlu0 %v1074, 32
    %v1083 = vpop.permute.xlu0 %1082
    %v1085 = vmul.f32 %v1073, %v1083
    %1087 = vrot.lane.b32.xlu0 %v1085, 32
    %v1088 = vpop.permute.xlu0 %1087
    %v1090 = vadd.f32 %v1080, %v1088
    %1092 = vrot.lane.b32.xlu0 %v1090, 96
    %v1093 = vpop.permute.xlu0 %1092
    %1095 = vst.msk [vmem:[#allocation4] sm:$0xff] %vm183, %v1093
    %v1096 = vtanh.pop %v1090
    %1098 = vrot.lane.b32.xlu0 %v1096, 32
    %v1099 = vpop.permute.xlu0 %1098
    %v1101 = vmul.f32 %v1073, %v1099
    %1103 = vrot.lane.b32.xlu0 %v1101, 64
    %v1104 = vpop.permute.xlu0 %1103
    %1106 = vst.msk [vmem:[#allocation3] sm:$0xff] %vm183, %v1104
    %v1107 = vxor.u32 %v1054, 2147483648
    %v1108 = vmul.f32 %v1107, 1.442695
    %v1109 = vpow.pop %v1108
    %v1110 = vadd.f32 %v1109, 1.0
    %v1111 = vrcp.pop %v1110
    %v1112 = vmul.f32 %v1110, %v1111
    %v1113 = vsub.f32 1.0, %v1112
    %v1114 = vmul.f32 %v1111, %v1113
    %v1115 = vadd.f32 %v1111, %v1114
    %vm1116 = vweird.f32 %v1110
    %vm1117 = vweird.f32 %v1111
    %vm1118 = vmor %vm1116, %vm1117
    %v1119 = vsel %vm1118, %v1111, %v1115
    %v1120 = vand.u32 2147483647, %v1110
    %vm1121 = vcmp.eq.f32.partialorder %v1120, 8.507059e+37
    %v1122 = vand.u32 %v1110, 2147483648
    %v1123 = vor.u32 1.1754944e-38, %v1122
    %v1124 = vsel %vm1121, %v1123, %v1119
    %v1125 = vmul.f32 1.0, %v1124
    %v1126 = vtanh.pop %v1054
    %v1127 = vld [vmem:[#allocation6] sm:$0xff]
    %1129 = vrot.lane.b32.xlu0 %v1127, 32
    %v1130 = vpop.permute.xlu0 %1129
    %v1132 = vmul.f32 %v1125, %v1130
    %1134 = vrot.lane.b32.xlu0 %v1126, 32
    %v1135 = vpop.permute.xlu0 %1134
    %v1137 = vmul.f32 %v1125, %v1135
    %1139 = vrot.lane.b32.xlu0 %v1137, 32
    %v1140 = vpop.permute.xlu0 %1139
    %v1142 = vadd.f32 %v1132, %v1140
    %1144 = vrot.lane.b32.xlu0 %v1142, 96
    %v1145 = vpop.permute.xlu0 %1144
    %1147 = vst.msk [vmem:[#allocation6] sm:$0xff] %vm183, %v1145
    %v1148 = vtanh.pop %v1142
    %1150 = vrot.lane.b32.xlu0 %v1148, 32
    %v1151 = vpop.permute.xlu0 %1150
    %v1153 = vmul.f32 %v1125, %v1151
    %1155 = vrot.lane.b32.xlu0 %v1153, 64
    %v1156 = vpop.permute.xlu0 %1155
    %1158 = vst.msk [vmem:[#allocation5] sm:$0xff] %vm183, %v1156
    %s1159 = scalar_lea.vmem [#allocation2], 96
    %v1160 = vld [vmem:[%s1159] sm:$0xff]
    %v1161 = vld [vmem:[#allocation3] sm:$0xff]
    %v1162 = vpack.c.bf16 %v1161, %v1161
    %v1163 = vld [vmem:[%s2] sm:$0xf]
    %v1164 = vld [vmem:[%s2 + $0x4] sm:$0xf]
    %v1165 = vld [vmem:[%s2 + $0x8] sm:$0xf]
    %v1166 = vld [vmem:[%s2 + $0xc] sm:$0xf]
    %v1171 = vunpack.c.l.b16 %v1163
    %v1172 = vunpack.c.l.b16 %v1164
    %v1173 = vunpack.c.l.b16 %v1165
    %v1174 = vunpack.c.l.b16 %v1166
    %v1175 = vpack.c.b16 %v1172, %v1171
    %v1176 = vpack.c.b16 %v1174, %v1173
    %v1180 = vsel %vm183, %v1162, 0
    %1182 = vmatpush.bf16.msra.mxu0 0
    %1183 = vmatpush.bf16.msra.mxu0 0
    %1184 = vmatpush.bf16.msra.mxu0 0
    %1185 = vmatpush.bf16.msra.mxu0 0
    %1186 = vmatpush.bf16.msra.mxu0 0
    %1187 = vmatpush.bf16.msra.mxu0 0
    %1188 = vmatpush.bf16.msra.mxu0 %v1176
    %1189 = vmatpush.bf16.msra.mxu0 %v1175
    %1190 = vmatmul.bf16.gmra.mxu0 %v1180
    %v1191 = vpop.f32.mrf.mxu0
    %v1192 = vadd.f32 0.0, %v1191
    %v1193 = vpop.f32.mrf.mxu0
    %1194 = vdwg.mxu0
    %v1195 = vadd.f32 %v1160, %v1192
    %s1196 = scalar_lea.vmem [#allocation2], 104
    %v1197 = vld [vmem:[%s1196] sm:$0xff]
    %v1198 = vld [vmem:[#allocation5] sm:$0xff]
    %v1199 = vpack.c.bf16 %v1198, %v1198
    %v1201 = vsel %vm183, %v1199, 0
    %1203 = vmatpush.bf16.msra.mxu0 0
    %1204 = vmatpush.bf16.msra.mxu0 0
    %1205 = vmatpush.bf16.msra.mxu0 0
    %1206 = vmatpush.bf16.msra.mxu0 0
    %1207 = vmatpush.bf16.msra.mxu0 0
    %1208 = vmatpush.bf16.msra.mxu0 0
    %1209 = vmatpush.bf16.msra.mxu0 %v1176
    %1210 = vmatpush.bf16.msra.mxu0 %v1175
    %1211 = vmatmul.bf16.gmra.mxu0 %v1201
    %v1212 = vpop.f32.mrf.mxu0
    %v1213 = vadd.f32 0.0, %v1212
    %v1214 = vpop.f32.mrf.mxu0
    %1215 = vdwg.mxu0
    %v1216 = vadd.f32 %v1197, %v1213
    %v1217 = vxor.u32 %v1195, 2147483648
    %v1218 = vmul.f32 %v1217, 1.442695
    %v1219 = vpow.pop %v1218
    %v1220 = vadd.f32 %v1219, 1.0
    %v1221 = vrcp.pop %v1220
    %v1222 = vmul.f32 %v1220, %v1221
    %v1223 = vsub.f32 1.0, %v1222
    %v1224 = vmul.f32 %v1221, %v1223
    %v1225 = vadd.f32 %v1221, %v1224
    %vm1226 = vweird.f32 %v1220
    %vm1227 = vweird.f32 %v1221
    %vm1228 = vmor %vm1226, %vm1227
    %v1229 = vsel %vm1228, %v1221, %v1225
    %v1230 = vand.u32 2147483647, %v1220
    %vm1231 = vcmp.eq.f32.partialorder %v1230, 8.507059e+37
    %v1232 = vand.u32 %v1220, 2147483648
    %v1233 = vor.u32 1.1754944e-38, %v1232
    %v1234 = vsel %vm1231, %v1233, %v1229
    %v1235 = vmul.f32 1.0, %v1234
    %v1236 = vtanh.pop %v1195
    %v1237 = vld [vmem:[#allocation4] sm:$0xff]
    %1239 = vrot.lane.b32.xlu0 %v1237, 32
    %v1240 = vpop.permute.xlu0 %1239
    %v1242 = vmul.f32 %v1235, %v1240
    %1244 = vrot.lane.b32.xlu0 %v1236, 32
    %v1245 = vpop.permute.xlu0 %1244
    %v1247 = vmul.f32 %v1235, %v1245
    %1249 = vrot.lane.b32.xlu0 %v1247, 32
    %v1250 = vpop.permute.xlu0 %1249
    %v1252 = vadd.f32 %v1242, %v1250
    %1254 = vrot.lane.b32.xlu0 %v1252, 96
    %v1255 = vpop.permute.xlu0 %1254
    %1257 = vst.msk [vmem:[#allocation4] sm:$0xff] %vm183, %v1255
    %v1258 = vtanh.pop %v1252
    %1260 = vrot.lane.b32.xlu0 %v1258, 32
    %v1261 = vpop.permute.xlu0 %1260
    %v1263 = vmul.f32 %v1235, %v1261
    %1265 = vrot.lane.b32.xlu0 %v1263, 64
    %v1266 = vpop.permute.xlu0 %1265
    %1268 = vst.msk [vmem:[#allocation3] sm:$0xff] %vm183, %v1266
    %v1269 = vxor.u32 %v1216, 2147483648
    %v1270 = vmul.f32 %v1269, 1.442695
    %v1271 = vpow.pop %v1270
    %v1272 = vadd.f32 %v1271, 1.0
    %v1273 = vrcp.pop %v1272
    %v1274 = vmul.f32 %v1272, %v1273
    %v1275 = vsub.f32 1.0, %v1274
    %v1276 = vmul.f32 %v1273, %v1275
    %v1277 = vadd.f32 %v1273, %v1276
    %vm1278 = vweird.f32 %v1272
    %vm1279 = vweird.f32 %v1273
    %vm1280 = vmor %vm1278, %vm1279
    %v1281 = vsel %vm1280, %v1273, %v1277
    %v1282 = vand.u32 2147483647, %v1272
    %vm1283 = vcmp.eq.f32.partialorder %v1282, 8.507059e+37
    %v1284 = vand.u32 %v1272, 2147483648
    %v1285 = vor.u32 1.1754944e-38, %v1284
    %v1286 = vsel %vm1283, %v1285, %v1281
    %v1287 = vmul.f32 1.0, %v1286
    %v1288 = vtanh.pop %v1216
    %v1289 = vld [vmem:[#allocation6] sm:$0xff]
    %1291 = vrot.lane.b32.xlu0 %v1289, 32
    %v1292 = vpop.permute.xlu0 %1291
    %v1294 = vmul.f32 %v1287, %v1292
    %1296 = vrot.lane.b32.xlu0 %v1288, 32
    %v1297 = vpop.permute.xlu0 %1296
    %v1299 = vmul.f32 %v1287, %v1297
    %1301 = vrot.lane.b32.xlu0 %v1299, 32
    %v1302 = vpop.permute.xlu0 %1301
    %v1304 = vadd.f32 %v1294, %v1302
    %1306 = vrot.lane.b32.xlu0 %v1304, 96
    %v1307 = vpop.permute.xlu0 %1306
    %1309 = vst.msk [vmem:[#allocation6] sm:$0xff] %vm183, %v1307
    %v1310 = vtanh.pop %v1304
    %1312 = vrot.lane.b32.xlu0 %v1310, 32
    %v1313 = vpop.permute.xlu0 %1312
    %v1315 = vmul.f32 %v1287, %v1313
    %1317 = vrot.lane.b32.xlu0 %v1315, 64
    %v1318 = vpop.permute.xlu0 %1317
    %1320 = vst.msk [vmem:[#allocation5] sm:$0xff] %vm183, %v1318
    %s1321 = scalar_lea.vmem [#allocation2], 112
    %v1322 = vld [vmem:[%s1321] sm:$0xff]
    %v1323 = vld [vmem:[#allocation3] sm:$0xff]
    %v1324 = vpack.c.bf16 %v1323, %v1323
    %v1325 = vld [vmem:[%s2] sm:$0xf]
    %v1326 = vld [vmem:[%s2 + $0x4] sm:$0xf]
    %v1327 = vld [vmem:[%s2 + $0x8] sm:$0xf]
    %v1328 = vld [vmem:[%s2 + $0xc] sm:$0xf]
    %v1333 = vunpack.c.l.b16 %v1325
    %v1334 = vunpack.c.l.b16 %v1326
    %v1335 = vunpack.c.l.b16 %v1327
    %v1336 = vunpack.c.l.b16 %v1328
    %v1337 = vpack.c.b16 %v1334, %v1333
    %v1338 = vpack.c.b16 %v1336, %v1335
    %v1342 = vsel %vm183, %v1324, 0
    %1344 = vmatpush.bf16.msra.mxu0 0
    %1345 = vmatpush.bf16.msra.mxu0 0
    %1346 = vmatpush.bf16.msra.mxu0 0
    %1347 = vmatpush.bf16.msra.mxu0 0
    %1348 = vmatpush.bf16.msra.mxu0 0
    %1349 = vmatpush.bf16.msra.mxu0 0
    %1350 = vmatpush.bf16.msra.mxu0 %v1338
    %1351 = vmatpush.bf16.msra.mxu0 %v1337
    %1352 = vmatmul.bf16.gmra.mxu0 %v1342
    %v1353 = vpop.f32.mrf.mxu0
    %v1354 = vadd.f32 0.0, %v1353
    %v1355 = vpop.f32.mrf.mxu0
    %1356 = vdwg.mxu0
    %v1357 = vadd.f32 %v1322, %v1354
    %s1358 = scalar_lea.vmem [#allocation2], 120
    %v1359 = vld [vmem:[%s1358] sm:$0xff]
    %v1360 = vld [vmem:[#allocation5] sm:$0xff]
    %v1361 = vpack.c.bf16 %v1360, %v1360
    %v1363 = vsel %vm183, %v1361, 0
    %1365 = vmatpush.bf16.msra.mxu0 0
    %1366 = vmatpush.bf16.msra.mxu0 0
    %1367 = vmatpush.bf16.msra.mxu0 0
    %1368 = vmatpush.bf16.msra.mxu0 0
    %1369 = vmatpush.bf16.msra.mxu0 0
    %1370 = vmatpush.bf16.msra.mxu0 0
    %1371 = vmatpush.bf16.msra.mxu0 %v1338
    %1372 = vmatpush.bf16.msra.mxu0 %v1337
    %1373 = vmatmul.bf16.gmra.mxu0 %v1363
    %v1374 = vpop.f32.mrf.mxu0
    %v1375 = vadd.f32 0.0, %v1374
    %v1376 = vpop.f32.mrf.mxu0
    %1377 = vdwg.mxu0
    %v1378 = vadd.f32 %v1359, %v1375
    %v1379 = vxor.u32 %v1357, 2147483648
    %v1380 = vmul.f32 %v1379, 1.442695
    %v1381 = vpow.pop %v1380
    %v1382 = vadd.f32 %v1381, 1.0
    %v1383 = vrcp.pop %v1382
    %v1384 = vmul.f32 %v1382, %v1383
    %v1385 = vsub.f32 1.0, %v1384
    %v1386 = vmul.f32 %v1383, %v1385
    %v1387 = vadd.f32 %v1383, %v1386
    %vm1388 = vweird.f32 %v1382
    %vm1389 = vweird.f32 %v1383
    %vm1390 = vmor %vm1388, %vm1389
    %v1391 = vsel %vm1390, %v1383, %v1387
    %v1392 = vand.u32 2147483647, %v1382
    %vm1393 = vcmp.eq.f32.partialorder %v1392, 8.507059e+37
    %v1394 = vand.u32 %v1382, 2147483648
    %v1395 = vor.u32 1.1754944e-38, %v1394
    %v1396 = vsel %vm1393, %v1395, %v1391
    %v1397 = vmul.f32 1.0, %v1396
    %v1398 = vtanh.pop %v1357
    %v1399 = vld [vmem:[#allocation4] sm:$0xff]
    %1401 = vrot.lane.b32.xlu0 %v1399, 32
    %v1402 = vpop.permute.xlu0 %1401
    %v1404 = vmul.f32 %v1397, %v1402
    %1406 = vrot.lane.b32.xlu0 %v1398, 32
    %v1407 = vpop.permute.xlu0 %1406
    %v1409 = vmul.f32 %v1397, %v1407
    %1411 = vrot.lane.b32.xlu0 %v1409, 32
    %v1412 = vpop.permute.xlu0 %1411
    %v1414 = vadd.f32 %v1404, %v1412
    %1416 = vrot.lane.b32.xlu0 %v1414, 96
    %v1417 = vpop.permute.xlu0 %1416
    %1419 = vst.msk [vmem:[#allocation4] sm:$0xff] %vm183, %v1417
    %v1420 = vtanh.pop %v1414
    %1422 = vrot.lane.b32.xlu0 %v1420, 32
    %v1423 = vpop.permute.xlu0 %1422
    %v1425 = vmul.f32 %v1397, %v1423
    %1427 = vrot.lane.b32.xlu0 %v1425, 64
    %v1428 = vpop.permute.xlu0 %1427
    %1430 = vst.msk [vmem:[#allocation3] sm:$0xff] %vm183, %v1428
    %v1431 = vxor.u32 %v1378, 2147483648
    %v1432 = vmul.f32 %v1431, 1.442695
    %v1433 = vpow.pop %v1432
    %v1434 = vadd.f32 %v1433, 1.0
    %v1435 = vrcp.pop %v1434
    %v1436 = vmul.f32 %v1434, %v1435
    %v1437 = vsub.f32 1.0, %v1436
    %v1438 = vmul.f32 %v1435, %v1437
    %v1439 = vadd.f32 %v1435, %v1438
    %vm1440 = vweird.f32 %v1434
    %vm1441 = vweird.f32 %v1435
    %vm1442 = vmor %vm1440, %vm1441
    %v1443 = vsel %vm1442, %v1435, %v1439
    %v1444 = vand.u32 2147483647, %v1434
    %vm1445 = vcmp.eq.f32.partialorder %v1444, 8.507059e+37
    %v1446 = vand.u32 %v1434, 2147483648
    %v1447 = vor.u32 1.1754944e-38, %v1446
    %v1448 = vsel %vm1445, %v1447, %v1443
    %v1449 = vmul.f32 1.0, %v1448
    %v1450 = vtanh.pop %v1378
    %v1451 = vld [vmem:[#allocation6] sm:$0xff]
    %1453 = vrot.lane.b32.xlu0 %v1451, 32
    %v1454 = vpop.permute.xlu0 %1453
    %v1456 = vmul.f32 %v1449, %v1454
    %1458 = vrot.lane.b32.xlu0 %v1450, 32
    %v1459 = vpop.permute.xlu0 %1458
    %v1461 = vmul.f32 %v1449, %v1459
    %1463 = vrot.lane.b32.xlu0 %v1461, 32
    %v1464 = vpop.permute.xlu0 %1463
    %v1466 = vadd.f32 %v1456, %v1464
    %1468 = vrot.lane.b32.xlu0 %v1466, 96
    %v1469 = vpop.permute.xlu0 %1468
    %1471 = vst.msk [vmem:[#allocation6] sm:$0xff] %vm183, %v1469
    %v1472 = vtanh.pop %v1466
    %1474 = vrot.lane.b32.xlu0 %v1472, 32
    %v1475 = vpop.permute.xlu0 %1474
    %v1477 = vmul.f32 %v1449, %v1475
    %1479 = vrot.lane.b32.xlu0 %v1477, 64
    %v1480 = vpop.permute.xlu0 %1479
    %1482 = vst.msk [vmem:[#allocation5] sm:$0xff] %vm183, %v1480
    %v1483 = vld [vmem:[#allocation3] sm:$0xff]
    %v1484 = vpack.c.bf16 %v1483, %v1483
    %v1485 = vld [vmem:[%s4] sm:$0xf]
    %v1486 = vld [vmem:[%s4 + $0x4] sm:$0xf]
    %v1487 = vld [vmem:[%s4 + $0x8] sm:$0xf]
    %v1488 = vld [vmem:[%s4 + $0xc] sm:$0xf]
    %v1489 = vld [vmem:[%s5] sm:$0x1]
    %v1491 = vperm.slane %v1489, 0
    %v1497 = vunpack.c.l.b16 %v1485
    %v1498 = vunpack.c.l.b16 %v1486
    %v1499 = vunpack.c.l.b16 %v1487
    %v1500 = vunpack.c.l.b16 %v1488
    %v1501 = vpack.c.b16 %v1498, %v1497
    %v1502 = vpack.c.b16 %v1500, %v1499
    %v1506 = vsel %vm183, %v1484, 0
    %1508 = vmatpush.bf16.msra.mxu0 0
    %1509 = vmatpush.bf16.msra.mxu0 0
    %1510 = vmatpush.bf16.msra.mxu0 0
    %1511 = vmatpush.bf16.msra.mxu0 0
    %1512 = vmatpush.bf16.msra.mxu0 0
    %1513 = vmatpush.bf16.msra.mxu0 0
    %1514 = vmatpush.bf16.msra.mxu0 %v1502
    %1515 = vmatpush.bf16.msra.mxu0 %v1501
    %1516 = vmatmul.bf16.gmra.mxu0 %v1506
    %v1517 = vpop.f32.mrf.mxu0
    %v1518 = vadd.f32 %v1491, %v1517
    %v1519 = vpop.f32.mrf.mxu0
    %1520 = vdwg.mxu0
    %1521 = vst [vmem:[#allocation7] sm:$0xff] %v1518
    %v1522 = vld [vmem:[#allocation5] sm:$0xff]
    %v1523 = vpack.c.bf16 %v1522, %v1522
    %v1524 = vld [vmem:[%s4] sm:$0xf]
    %v1525 = vld [vmem:[%s4 + $0x4] sm:$0xf]
    %v1526 = vld [vmem:[%s4 + $0x8] sm:$0xf]
    %v1527 = vld [vmem:[%s4 + $0xc] sm:$0xf]
    %v1528 = vld [vmem:[%s5] sm:$0x1]
    %v1530 = vperm.slane %v1528, 0
    %v1536 = vunpack.c.l.b16 %v1524
    %v1537 = vunpack.c.l.b16 %v1525
    %v1538 = vunpack.c.l.b16 %v1526
    %v1539 = vunpack.c.l.b16 %v1527
    %v1540 = vpack.c.b16 %v1537, %v1536
    %v1541 = vpack.c.b16 %v1539, %v1538
    %v1545 = vsel %vm183, %v1523, 0
    %1547 = vmatpush.bf16.msra.mxu0 0
    %1548 = vmatpush.bf16.msra.mxu0 0
    %1549 = vmatpush.bf16.msra.mxu0 0
    %1550 = vmatpush.bf16.msra.mxu0 0
    %1551 = vmatpush.bf16.msra.mxu0 0
    %1552 = vmatpush.bf16.msra.mxu0 0
    %1553 = vmatpush.bf16.msra.mxu0 %v1541
    %1554 = vmatpush.bf16.msra.mxu0 %v1540
    %1555 = vmatmul.bf16.gmra.mxu0 %v1545
    %v1556 = vpop.f32.mrf.mxu0
    %v1557 = vadd.f32 %v1530, %v1556
    %v1558 = vpop.f32.mrf.mxu0
    %1559 = vdwg.mxu0
    %1560 = vst [vmem:[#allocation7 + $0x8] sm:$0xff] %v1557
    // Predicated region
    $region26: #{tpu_custom_call.1} parent=1 // pred_check
      _
    $region27: #{tpu_custom_call.1} parent=1 // pred_check_branch
      %1562 = sbr.rel (0) target = $region29
    $region28: #{tpu_custom_call.1} parent=1 // pred_region
      %1564 = vsyncadd [#allocation8], 0
      %s1565 = sshll.u32 [#allocation7], 4
      %s1566 = int_to_ptr.vmem [resolvable:$true] %s1565
      %s1567 = sshll.u32 %s6, 4
      %s1568 = int_to_ptr.hbm [resolvable:$true] %s1567
      %1573 = dma.vmem_to_hbm [thread:$0]  %s1566, 256, %s1568, [#allocation8], 128, 128, 8
    $region29: #{tpu_custom_call.1} parent=1 // pred_fallthru
      _
    // Predicated region
    $region30: #{tpu_custom_call.1} parent=1 // pred_check
      _
    $region31: #{tpu_custom_call.1} parent=1 // pred_check_branch
      %1575 = sbr.rel (0) target = $region33
    $region32: #{tpu_custom_call.1} parent=1 // pred_region
      %1577 = dma.done [#allocation8], 256
    $region33: #{tpu_custom_call.1} parent=1 // pred_fallthru
      _
    %1578 = vsyncpa [#allocation8], 1

</llo_original>
